<compile_context>
chip_gen: v6e
topology: v6e:2x2x1
jax: 0.10.0
libtpu: 0.0.40
codegen_flags: <defaults>
</compile_context>

<pallas_src>
import jax
import jax.numpy as jnp
from jax.experimental import pallas as pl
from jax.experimental.pallas import tpu as pltpu

EPS = 1e-5


def _band_weights(w_hwio, width, dtype):
    """(3,3,Ci,Co) HWIO -> (3, W*Ci, W*Co) block-banded matrices folding dx taps + col padding.

    Wb[dy][u*Ci + ci, w*Co + co] = w[dy, dx, ci, co]  with u = w + dx - 1 and 0 <= u < W, so
      conv_out[h, w, co] = sum_dy ( padded_rows[h+dy, :] @ Wb[dy] )[w*Co + co].
    """
    kh, kw, cin, cout = w_hwio.shape
    u = jnp.arange(width)
    w = jnp.arange(width)
    dx = jnp.arange(kw)
    sel = (u[None, :, None] == w[None, None, :] + dx[:, None, None] - 1)          # (kw, W, W)
    wb = jnp.einsum("xuw,yxio->yuiwo", sel.astype(jnp.float32), w_hwio.astype(jnp.float32))
    return wb.reshape(kh, width * cin, width * cout).astype(dtype)


def _bn_lane_params(stat_partials, gamma, beta, width, channels, count):
    """Fold per-step partial [sum; sum_sq] lane stats into per-lane (1, W*C) scale / shift."""
    s = stat_partials.sum(axis=0).reshape(2, width, channels).sum(axis=1)          # (2, C)
    mean = s[0] / count
    var = jnp.maximum(s[1] / count - mean * mean, 0.0)   # clamp: one-pass var can cancel < 0
    scale = gamma / jnp.sqrt(var + EPS)
    shift = beta - mean * scale
    lane = lambda v: jnp.tile(v, width).reshape(1, width * channels)
    return lane(scale), lane(shift)


def _pick_nb(n, h, wc, target_rows=256, max_scratch_bytes=2 << 20):
    """Largest divisor of n such that Nb*(H+2) ~ target_rows and the bf16 scratch stays small."""
    cap = max(1, target_rows // (h + 2))
    cap = min(cap, max(1, max_scratch_bytes // ((h + 2) * wc * 2)))
    best = 1
    for d in range(1, n + 1):
        if n % d == 0 and d <= cap:
            best = d
    return best


def _pick_rows(total, wc, target_bytes=1 << 20):
    """Row-block size for the elementwise phase: divisor of total, multiple of 8 (or full)."""
    cap = max(8, target_bytes // (wc * 4))
    cands = [d for d in range(1, total + 1)
             if total % d == 0 and d <= cap and (d % 8 == 0 or d == total)]
    return max(cands) if cands else total


def basic_block_forward_nhwc(x_nhwc, w1, w2, g1, b1, g2, b2):
    """NHWC BasicBlock forward.  x: (N,H,W,C); w1,w2: (3,3,C,C) HWIO; g*,b*: (C,)."""
    N, H, W, C = x_nhwc.shape
    WC = W * C
    count = float(N * H * W)
    f32 = jnp.float32
    bf16 = jnp.bfloat16

    x_rows_bf16 = x_nhwc.astype(bf16).reshape(N, H, WC)       # conv1 input (lane-dense rows)
    x_rows_f32 = x_nhwc.astype(f32).reshape(N * H, WC)        # residual kept in input precision
    wb1 = _band_weights(w1, W, bf16)                          # (3, WC, WC) bf16
    wb2 = _band_weights(w2, W, bf16)

    Nb = _pick_nb(N, H, WC)            # images per grid step (divides N)
    G = N // Nb
    Mp = Nb * (H + 2)                  # rows of the zero-separated padded stack per step

    blk_spec = pl.BlockSpec((Nb, H, WC), lambda g: (g, 0, 0))
    wb_spec = pl.BlockSpec((3, WC, WC), lambda g: (0, 0, 0))
    vec_spec = pl.BlockSpec((1, WC), lambda g: (0, 0))
    stat_spec = pl.BlockSpec((None, 2, WC), lambda g: (g, 0, 0))   # one partial per step

    # ---- in-kernel helpers (closed over H / WC / Nb / Mp) ------------------------------------
    def write_padded(p_ref, n, rows):
        base = n * (H + 2)
        # halos are zeroed unconditionally every step: no persistent-scratch dependence,
        # which is what allows the batch grid axis to be "parallel".
        p_ref[base:base + 1, :] = jnp.zeros((1, WC), p_ref.dtype)
        p_ref[base + 1:base + 1 + H, :] = rows
        p_ref[base + H + 1:base + H + 2, :] = jnp.zeros((1, WC), p_ref.dtype)

    def conv_stack(p_ref, wb_ref):
        # three lane-dense bf16 MXU dots over the whole Nb-image padded stack (M = Mp - 2);
        # dx taps and column padding are folded into the banded weights.
        acc = jnp.dot(p_ref[0:Mp - 2, :], wb_ref[0], preferred_element_type=f32)
        acc += jnp.dot(p_ref[1:Mp - 1, :], wb_ref[1], preferred_element_type=f32)
        acc += jnp.dot(p_ref[2:Mp, :], wb_ref[2], preferred_element_type=f32)
        return acc                                              # (Mp-2, WC) f32

    def emit(acc, y_ref, s_ref):
        # extract the H valid rows per image, store bf16 y, accumulate f32 stats from f32 acc
        s0 = jnp.zeros((1, WC), f32)
        s1 = jnp.zeros((1, WC), f32)
        for n in range(Nb):
            v = acc[n * (H + 2):n * (H + 2) + H, :]
            y_ref[n] = v.astype(y_ref.dtype)
            s0 = s0 + jnp.sum(v, axis=0, keepdims=True)
            s1 = s1 + jnp.sum(v * v, axis=0, keepdims=True)
        s_ref[0:1, :] = s0
        s_ref[1:2, :] = s1

    # ---- phase A: conv1 + per-step batch stats ------------------------------------------------
    def kernel_a(x_ref, wb_ref, y_ref, s_ref, p_ref):
        for n in range(Nb):
            write_padded(p_ref, n, x_ref[n])
        emit(conv_stack(p_ref, wb_ref), y_ref, s_ref)

    y1, s1p = pl.pallas_call(
        kernel_a,
        grid=(G,),
        in_specs=[blk_spec, wb_spec],
        out_specs=(blk_spec, stat_spec),
        out_shape=(jax.ShapeDtypeStruct((N, H, WC), bf16),
                   jax.ShapeDtypeStruct((G, 2, WC), f32)),
        scratch_shapes=[pltpu.VMEM((Mp, WC), bf16)],
        compiler_params=pltpu.CompilerParams(dimension_semantics=("parallel",)),
    )(x_rows_bf16, wb1)

    sc1, sh1 = _bn_lane_params(s1p, g1.astype(f32), b1.astype(f32), W, C, count)

    # ---- phase B: bn1 + relu + conv2 + per-step batch stats -----------------------------------
    def kernel_b(y1_ref, sc_ref, sh_ref, wb_ref, y_ref, s_ref, p_ref):
        for n in range(Nb):
            z = jnp.maximum(y1_ref[n].astype(f32) * sc_ref[...] + sh_ref[...], 0.0)
            write_padded(p_ref, n, z.astype(p_ref.dtype))
        emit(conv_stack(p_ref, wb_ref), y_ref, s_ref)

    y2, s2p = pl.pallas_call(
        kernel_b,
        grid=(G,),
        in_specs=[blk_spec, vec_spec, vec_spec, wb_spec],
        out_specs=(blk_spec, stat_spec),
        out_shape=(jax.ShapeDtypeStruct((N, H, WC), bf16),
                   jax.ShapeDtypeStruct((G, 2, WC), f32)),
        scratch_shapes=[pltpu.VMEM((Mp, WC), bf16)],
        compiler_params=pltpu.CompilerParams(dimension_semantics=("parallel",)),
    )(y1, sc1, sh1, wb2)

    sc2, sh2 = _bn_lane_params(s2p, g2.astype(f32), b2.astype(f32), W, C, count)

    # ---- phase C: bn2 + residual add + relu over large lane-dense row slabs -------------------
    NH = N * H
    TR = _pick_rows(NH, WC)
    row_spec = pl.BlockSpec((TR, WC), lambda r: (r, 0))
    cvec_spec = pl.BlockSpec((1, WC), lambda r: (0, 0))

    def kernel_c(y2_ref, sc_ref, sh_ref, x_ref, o_ref):
        o_ref[...] = jnp.maximum(
            y2_ref[...].astype(f32) * sc_ref[...] + sh_ref[...] + x_ref[...], 0.0)

    out2 = pl.pallas_call(
        kernel_c,
        grid=(NH // TR,),
        in_specs=[row_spec, cvec_spec, cvec_spec, row_spec],
        out_specs=row_spec,
        out_shape=jax.ShapeDtypeStruct((NH, WC), f32),
        compiler_params=pltpu.CompilerParams(dimension_semantics=("parallel",)),
    )(y2.reshape(NH, WC), sc2, sh2, x_rows_f32)

    # TODO(synk): training-mode BatchNorm also updates running_mean/running_var buffers (a module
    # side effect); they are not produced here and do not affect the forward output.
    return out2.reshape(N, H, W, C)


@jax.jit
def basic_block_forward(x_nchw, w1, w2, g1, b1, g2, b2):
    """NCHW wrapper matching the PyTorch module interface.  In an NHWC pipeline call
    basic_block_forward_nhwc directly: the two transposes below exist only to honor the
    torch layout and each is a full-tensor HBM round trip."""
    x = jnp.transpose(x_nchw, (0, 2, 3, 1))
    out = basic_block_forward_nhwc(x, w1, w2, g1, b1, g2, b2)
    return jnp.transpose(out, (0, 3, 1, 2))


def _reference(x_nchw, w1, w2, g1, b1, g2, b2):
    """Pure-JAX f32 reference (NHWC conv + training-mode BN)."""
    x = jnp.transpose(x_nchw, (0, 2, 3, 1))

    def conv(y, w):
        return jax.lax.conv_general_dilated(
            y, w, window_strides=(1, 1), padding=((1, 1), (1, 1)),
            dimension_numbers=("NHWC", "HWIO", "NHWC"))

    def bn(y, g, b):
        mean = jnp.mean(y, axis=(0, 1, 2), keepdims=True)
        var = jnp.mean((y - mean) ** 2, axis=(0, 1, 2), keepdims=True)
        return (y - mean) * g / jnp.sqrt(var + EPS) + b

    out = jnp.maximum(bn(conv(x, w1), g1, b1), 0.0)
    out = bn(conv(out, w2), g2, b2)
    out = jnp.maximum(out + x, 0.0)
    return jnp.transpose(out, (0, 3, 1, 2))


if __name__ == "__main__":
    N, C, H, W = 2, 8, 16, 16   # inplanes == planes == 8, stride=1, downsample=None; W*C = 128

    key = jax.random.PRNGKey(0)
    kx, k1, k2, kg1, kb1, kg2, kb2 = jax.random.split(key, 7)

    x = jax.random.normal(kx, (N, C, H, W), dtype=jnp.float32)
    w1 = 0.1 * jax.random.normal(k1, (3, 3, C, C), dtype=jnp.float32)    # HWIO
    w2 = 0.1 * jax.random.normal(k2, (3, 3, C, C), dtype=jnp.float32)    # HWIO
    g1 = 1.0 + 0.1 * jax.random.normal(kg1, (C,), dtype=jnp.float32)
    b1 = 0.1 * jax.random.normal(kb1, (C,), dtype=jnp.float32)
    g2 = 1.0 + 0.1 * jax.random.normal(kg2, (C,), dtype=jnp.float32)
    b2 = 0.1 * jax.random.normal(kb2, (C,), dtype=jnp.float32)

    out = jax.block_until_ready(basic_block_forward(x, w1, w2, g1, b1, g2, b2))
    ref = _reference(x, w1, w2, g1, b1, g2, b2)

    assert out.shape == (N, C, H, W)
    err = float(jnp.max(jnp.abs(out - ref)))
    # bf16 activation/weight path vs f32 reference -> loosened tolerance (review note)
    assert jnp.allclose(out, ref, atol=4e-2, rtol=4e-2), f"max abs diff = {err}"

    print("KERNEL_OK")
</pallas_src>

<mosaic_0001>
module attributes {stable_mosaic.version = 11 : i64} {
  func.func @kernel_a(%arg0: i32, %arg1: memref<2x16x128xbf16, #tpu.memory_space<vmem>>, %arg2: memref<3x128x128xbf16, #tpu.memory_space<vmem>>, %arg3: memref<2x16x128xbf16, #tpu.memory_space<vmem>>, %arg4: memref<1x2x128xf32, #tpu.memory_space<vmem>>, %arg5: memref<36x128xbf16, #tpu.memory_space<vmem>>) attributes {dimension_semantics = [#tpu.dimension_semantics<parallel>], iteration_bounds = array<i64: 1>, scalar_prefetch = 0 : i64, scratch_operands = 1 : i64, tpu.core_type = #tpu.core_type<tc>, window_params = [{transform_indices = @transform_0, window_bounds = array<i64: 2, 16, 128>}, {pipeline_mode = #tpu.pipeline_mode<synchronous>, transform_indices = @transform_1, window_bounds = array<i64: 3, 128, 128>}, {transform_indices = @transform_2, window_bounds = array<i64: 2, 16, 128>}, {transform_indices = @transform_3, window_bounds = array<i64: 1, 2, 128>}]} {
    %c0 = arith.constant 0 : index
    %c0_0 = arith.constant 0 : index
    %c0_1 = arith.constant 0 : index
    %0 = vector.load %arg1[%c0, %c0_0, %c0_1] : memref<2x16x128xbf16, #tpu.memory_space<vmem>>, vector<1x16x128xbf16>
    %1 = vector.shape_cast %0 : vector<1x16x128xbf16> to vector<16x128xbf16>
    %cst = arith.constant 0.000000e+00 : bf16
    %2 = vector.broadcast %cst : bf16 to vector<1x128xbf16>
    %c0_2 = arith.constant 0 : index
    %c0_3 = arith.constant 0 : index
    %3 = vector.load %arg5[%c0_2, %c0_3] : memref<36x128xbf16, #tpu.memory_space<vmem>>, vector<1x128xbf16>
    tpu.vector_store %arg5[%c0_2, %c0_3], %2 {strides = array<i32>} : memref<36x128xbf16, #tpu.memory_space<vmem>>, vector<1x128xbf16>,
    %c1 = arith.constant 1 : index
    %c0_4 = arith.constant 0 : index
    %4 = vector.load %arg5[%c1, %c0_4] : memref<36x128xbf16, #tpu.memory_space<vmem>>, vector<16x128xbf16>
    tpu.vector_store %arg5[%c1, %c0_4], %1 {strides = array<i32>} : memref<36x128xbf16, #tpu.memory_space<vmem>>, vector<16x128xbf16>,
    %cst_5 = arith.constant 0.000000e+00 : bf16
    %5 = vector.broadcast %cst_5 : bf16 to vector<1x128xbf16>
    %c17 = arith.constant 17 : index
    %c0_6 = arith.constant 0 : index
    %6 = vector.load %arg5[%c17, %c0_6] : memref<36x128xbf16, #tpu.memory_space<vmem>>, vector<1x128xbf16>
    tpu.vector_store %arg5[%c17, %c0_6], %5 {strides = array<i32>} : memref<36x128xbf16, #tpu.memory_space<vmem>>, vector<1x128xbf16>,
    %c1_7 = arith.constant 1 : index
    %c0_8 = arith.constant 0 : index
    %c0_9 = arith.constant 0 : index
    %7 = vector.load %arg1[%c1_7, %c0_8, %c0_9] : memref<2x16x128xbf16, #tpu.memory_space<vmem>>, vector<1x16x128xbf16>
    %8 = vector.shape_cast %7 : vector<1x16x128xbf16> to vector<16x128xbf16>
    %cst_10 = arith.constant 0.000000e+00 : bf16
    %9 = vector.broadcast %cst_10 : bf16 to vector<1x128xbf16>
    %c18 = arith.constant 18 : index
    %c0_11 = arith.constant 0 : index
    %10 = vector.load %arg5[%c18, %c0_11] : memref<36x128xbf16, #tpu.memory_space<vmem>>, vector<1x128xbf16>
    tpu.vector_store %arg5[%c18, %c0_11], %9 {strides = array<i32>} : memref<36x128xbf16, #tpu.memory_space<vmem>>, vector<1x128xbf16>,
    %c19 = arith.constant 19 : index
    %c0_12 = arith.constant 0 : index
    %11 = vector.load %arg5[%c19, %c0_12] : memref<36x128xbf16, #tpu.memory_space<vmem>>, vector<16x128xbf16>
    tpu.vector_store %arg5[%c19, %c0_12], %8 {strides = array<i32>} : memref<36x128xbf16, #tpu.memory_space<vmem>>, vector<16x128xbf16>,
    %cst_13 = arith.constant 0.000000e+00 : bf16
    %12 = vector.broadcast %cst_13 : bf16 to vector<1x128xbf16>
    %c35 = arith.constant 35 : index
    %c0_14 = arith.constant 0 : index
    %13 = vector.load %arg5[%c35, %c0_14] : memref<36x128xbf16, #tpu.memory_space<vmem>>, vector<1x128xbf16>
    tpu.vector_store %arg5[%c35, %c0_14], %12 {strides = array<i32>} : memref<36x128xbf16, #tpu.memory_space<vmem>>, vector<1x128xbf16>,
    %c0_15 = arith.constant 0 : index
    %c0_16 = arith.constant 0 : index
    %14 = vector.load %arg5[%c0_15, %c0_16] : memref<36x128xbf16, #tpu.memory_space<vmem>>, vector<34x128xbf16>
    %c0_17 = arith.constant 0 : index
    %c0_18 = arith.constant 0 : index
    %c0_19 = arith.constant 0 : index
    %15 = vector.load %arg2[%c0_17, %c0_18, %c0_19] : memref<3x128x128xbf16, #tpu.memory_space<vmem>>, vector<1x128x128xbf16>
    %16 = vector.shape_cast %15 : vector<1x128x128xbf16> to vector<128x128xbf16>
    %cst_20 = arith.constant dense<0.000000e+00> : vector<34x128xf32>
    %17 = tpu.matmul %14, %16, %cst_20 {dimension_numbers = #tpu.dot_dimension_numbers<[1], [0], [0], [1], [0, 0, 1, 1], [], []>} : vector<34x128xbf16>, vector<128x128xbf16>, vector<34x128xf32> -> vector<34x128xf32>
    %c1_21 = arith.constant 1 : index
    %c0_22 = arith.constant 0 : index
    %18 = vector.load %arg5[%c1_21, %c0_22] : memref<36x128xbf16, #tpu.memory_space<vmem>>, vector<34x128xbf16>
    %c1_23 = arith.constant 1 : index
    %c0_24 = arith.constant 0 : index
    %c0_25 = arith.constant 0 : index
    %19 = vector.load %arg2[%c1_23, %c0_24, %c0_25] : memref<3x128x128xbf16, #tpu.memory_space<vmem>>, vector<1x128x128xbf16>
    %20 = vector.shape_cast %19 : vector<1x128x128xbf16> to vector<128x128xbf16>
    %cst_26 = arith.constant dense<0.000000e+00> : vector<34x128xf32>
    %21 = tpu.matmul %18, %20, %cst_26 {dimension_numbers = #tpu.dot_dimension_numbers<[1], [0], [0], [1], [0, 0, 1, 1], [], []>} : vector<34x128xbf16>, vector<128x128xbf16>, vector<34x128xf32> -> vector<34x128xf32>
    %22 = arith.addf %17, %21 : vector<34x128xf32>
    %c2 = arith.constant 2 : index
    %c0_27 = arith.constant 0 : index
    %23 = vector.load %arg5[%c2, %c0_27] : memref<36x128xbf16, #tpu.memory_space<vmem>>, vector<34x128xbf16>
    %c2_28 = arith.constant 2 : index
    %c0_29 = arith.constant 0 : index
    %c0_30 = arith.constant 0 : index
    %24 = vector.load %arg2[%c2_28, %c0_29, %c0_30] : memref<3x128x128xbf16, #tpu.memory_space<vmem>>, vector<1x128x128xbf16>
    %25 = vector.shape_cast %24 : vector<1x128x128xbf16> to vector<128x128xbf16>
    %cst_31 = arith.constant dense<0.000000e+00> : vector<34x128xf32>
    %26 = tpu.matmul %23, %25, %cst_31 {dimension_numbers = #tpu.dot_dimension_numbers<[1], [0], [0], [1], [0, 0, 1, 1], [], []>} : vector<34x128xbf16>, vector<128x128xbf16>, vector<34x128xf32> -> vector<34x128xf32>
    %27 = arith.addf %22, %26 : vector<34x128xf32>
    %cst_32 = arith.constant 0.000000e+00 : f32
    %28 = vector.broadcast %cst_32 : f32 to vector<1x128xf32>
    %cst_33 = arith.constant 0.000000e+00 : f32
    %29 = vector.broadcast %cst_33 : f32 to vector<1x128xf32>
    %30 = vector.extract_strided_slice %27 {offsets = [0, 0], sizes = [16, 128], strides = [1, 1]} : vector<34x128xf32> to vector<16x128xf32>
    %31 = arith.truncf %30 : vector<16x128xf32> to vector<16x128xbf16>
    %c0_34 = arith.constant 0 : index
    %c0_35 = arith.constant 0 : index
    %c0_36 = arith.constant 0 : index
    %32 = vector.load %arg3[%c0_34, %c0_35, %c0_36] : memref<2x16x128xbf16, #tpu.memory_space<vmem>>, vector<1x16x128xbf16>
    %33 = vector.shape_cast %32 : vector<1x16x128xbf16> to vector<16x128xbf16>
    %34 = vector.shape_cast %31 : vector<16x128xbf16> to vector<1x16x128xbf16>
    tpu.vector_store %arg3[%c0_34, %c0_35, %c0_36], %34 {strides = array<i32>} : memref<2x16x128xbf16, #tpu.memory_space<vmem>>, vector<1x16x128xbf16>,
    %cst_37 = arith.constant dense<0.000000e+00> : vector<128xf32>
    %35 = vector.multi_reduction <add>, %30, %cst_37 [0] : vector<16x128xf32> to vector<128xf32>
    %36 = vector.shape_cast %35 : vector<128xf32> to vector<1x128xf32>
    %37 = arith.addf %28, %36 : vector<1x128xf32>
    %38 = arith.mulf %30, %30 : vector<16x128xf32>
    %cst_38 = arith.constant dense<0.000000e+00> : vector<128xf32>
    %39 = vector.multi_reduction <add>, %38, %cst_38 [0] : vector<16x128xf32> to vector<128xf32>
    %40 = vector.shape_cast %39 : vector<128xf32> to vector<1x128xf32>
    %41 = arith.addf %29, %40 : vector<1x128xf32>
    %42 = vector.extract_strided_slice %27 {offsets = [18, 0], sizes = [16, 128], strides = [1, 1]} : vector<34x128xf32> to vector<16x128xf32>
    %43 = arith.truncf %42 : vector<16x128xf32> to vector<16x128xbf16>
    %c1_39 = arith.constant 1 : index
    %c0_40 = arith.constant 0 : index
    %c0_41 = arith.constant 0 : index
    %44 = vector.load %arg3[%c1_39, %c0_40, %c0_41] : memref<2x16x128xbf16, #tpu.memory_space<vmem>>, vector<1x16x128xbf16>
    %45 = vector.shape_cast %44 : vector<1x16x128xbf16> to vector<16x128xbf16>
    %46 = vector.shape_cast %43 : vector<16x128xbf16> to vector<1x16x128xbf16>
    tpu.vector_store %arg3[%c1_39, %c0_40, %c0_41], %46 {strides = array<i32>} : memref<2x16x128xbf16, #tpu.memory_space<vmem>>, vector<1x16x128xbf16>,
    %cst_42 = arith.constant dense<0.000000e+00> : vector<128xf32>
    %47 = vector.multi_reduction <add>, %42, %cst_42 [0] : vector<16x128xf32> to vector<128xf32>
    %48 = vector.shape_cast %47 : vector<128xf32> to vector<1x128xf32>
    %49 = arith.addf %37, %48 : vector<1x128xf32>
    %50 = arith.mulf %42, %42 : vector<16x128xf32>
    %cst_43 = arith.constant dense<0.000000e+00> : vector<128xf32>
    %51 = vector.multi_reduction <add>, %50, %cst_43 [0] : vector<16x128xf32> to vector<128xf32>
    %52 = vector.shape_cast %51 : vector<128xf32> to vector<1x128xf32>
    %53 = arith.addf %41, %52 : vector<1x128xf32>
    %c0_44 = arith.constant 0 : index
    %c0_45 = arith.constant 0 : index
    %c0_46 = arith.constant 0 : index
    %54 = vector.load %arg4[%c0_44, %c0_45, %c0_46] : memref<1x2x128xf32, #tpu.memory_space<vmem>>, vector<1x1x128xf32>
    %55 = vector.shape_cast %54 : vector<1x1x128xf32> to vector<1x128xf32>
    %56 = vector.shape_cast %49 : vector<1x128xf32> to vector<1x1x128xf32>
    tpu.vector_store %arg4[%c0_44, %c0_45, %c0_46], %56 {strides = array<i32>} : memref<1x2x128xf32, #tpu.memory_space<vmem>>, vector<1x1x128xf32>,
    %c0_47 = arith.constant 0 : index
    %c1_48 = arith.constant 1 : index
    %c0_49 = arith.constant 0 : index
    %57 = vector.load %arg4[%c0_47, %c1_48, %c0_49] : memref<1x2x128xf32, #tpu.memory_space<vmem>>, vector<1x1x128xf32>
    %58 = vector.shape_cast %57 : vector<1x1x128xf32> to vector<1x128xf32>
    %59 = vector.shape_cast %53 : vector<1x128xf32> to vector<1x1x128xf32>
    tpu.vector_store %arg4[%c0_47, %c1_48, %c0_49], %59 {strides = array<i32>} : memref<1x2x128xf32, #tpu.memory_space<vmem>>, vector<1x1x128xf32>,
    return
  }
  func.func @transform_0(%arg0: i32) -> (i32, i32, i32) {
    %c0_i32 = arith.constant 0 : i32
    %c0_i32_0 = arith.constant 0 : i32
    %c0_i32_1 = arith.constant 0 : i32
    return %arg0, %c0_i32, %c0_i32_0 : i32, i32, i32
  }
  func.func @transform_1(%arg0: i32) -> (i32, i32, i32) {
    %c0_i32 = arith.constant 0 : i32
    %c0_i32_0 = arith.constant 0 : i32
    %c0_i32_1 = arith.constant 0 : i32
    %c0_i32_2 = arith.constant 0 : i32
    return %c0_i32, %c0_i32_0, %c0_i32_1 : i32, i32, i32
  }
  func.func @transform_2(%arg0: i32) -> (i32, i32, i32) {
    %c0_i32 = arith.constant 0 : i32
    %c0_i32_0 = arith.constant 0 : i32
    %c0_i32_1 = arith.constant 0 : i32
    return %arg0, %c0_i32, %c0_i32_0 : i32, i32, i32
  }
  func.func @transform_3(%arg0: i32) -> (i32, i32, i32) {
    %c0_i32 = arith.constant 0 : i32
    %c0_i32_0 = arith.constant 0 : i32
    %c0_i32_1 = arith.constant 0 : i32
    return %arg0, %c0_i32, %c0_i32_0 : i32, i32, i32
  }
}

module attributes {stable_mosaic.version = 11 : i64} {
  func.func @kernel_b(%arg0: i32, %arg1: memref<2x16x128xbf16, #tpu.memory_space<vmem>>, %arg2: memref<1x128xf32, #tpu.memory_space<vmem>>, %arg3: memref<1x128xf32, #tpu.memory_space<vmem>>, %arg4: memref<3x128x128xbf16, #tpu.memory_space<vmem>>, %arg5: memref<2x16x128xbf16, #tpu.memory_space<vmem>>, %arg6: memref<1x2x128xf32, #tpu.memory_space<vmem>>, %arg7: memref<36x128xbf16, #tpu.memory_space<vmem>>) attributes {dimension_semantics = [#tpu.dimension_semantics<parallel>], iteration_bounds = array<i64: 1>, scalar_prefetch = 0 : i64, scratch_operands = 1 : i64, tpu.core_type = #tpu.core_type<tc>, window_params = [{transform_indices = @transform_0, window_bounds = array<i64: 2, 16, 128>}, {pipeline_mode = #tpu.pipeline_mode<synchronous>, transform_indices = @transform_1, window_bounds = array<i64: 1, 128>}, {pipeline_mode = #tpu.pipeline_mode<synchronous>, transform_indices = @transform_2, window_bounds = array<i64: 1, 128>}, {pipeline_mode = #tpu.pipeline_mode<synchronous>, transform_indices = @transform_3, window_bounds = array<i64: 3, 128, 128>}, {transform_indices = @transform_4, window_bounds = array<i64: 2, 16, 128>}, {transform_indices = @transform_5, window_bounds = array<i64: 1, 2, 128>}]} {
    %c0 = arith.constant 0 : index
    %c0_0 = arith.constant 0 : index
    %c0_1 = arith.constant 0 : index
    %0 = vector.load %arg1[%c0, %c0_0, %c0_1] : memref<2x16x128xbf16, #tpu.memory_space<vmem>>, vector<1x16x128xbf16>
    %1 = vector.shape_cast %0 : vector<1x16x128xbf16> to vector<16x128xbf16>
    %2 = arith.extf %1 : vector<16x128xbf16> to vector<16x128xf32>
    %c0_2 = arith.constant 0 : index
    %c0_3 = arith.constant 0 : index
    %3 = vector.load %arg2[%c0_2, %c0_3] : memref<1x128xf32, #tpu.memory_space<vmem>>, vector<1x128xf32>
    %4 = vector.broadcast %3 : vector<1x128xf32> to vector<16x128xf32>
    %5 = arith.mulf %2, %4 : vector<16x128xf32>
    %c0_4 = arith.constant 0 : index
    %c0_5 = arith.constant 0 : index
    %6 = vector.load %arg3[%c0_4, %c0_5] : memref<1x128xf32, #tpu.memory_space<vmem>>, vector<1x128xf32>
    %7 = vector.broadcast %6 : vector<1x128xf32> to vector<16x128xf32>
    %8 = arith.addf %5, %7 : vector<16x128xf32>
    %cst = arith.constant 0.000000e+00 : f32
    %9 = vector.broadcast %cst : f32 to vector<16x128xf32>
    %10 = arith.maximumf %8, %9 : vector<16x128xf32>
    %11 = arith.truncf %10 : vector<16x128xf32> to vector<16x128xbf16>
    %cst_6 = arith.constant 0.000000e+00 : bf16
    %12 = vector.broadcast %cst_6 : bf16 to vector<1x128xbf16>
    %c0_7 = arith.constant 0 : index
    %c0_8 = arith.constant 0 : index
    %13 = vector.load %arg7[%c0_7, %c0_8] : memref<36x128xbf16, #tpu.memory_space<vmem>>, vector<1x128xbf16>
    tpu.vector_store %arg7[%c0_7, %c0_8], %12 {strides = array<i32>} : memref<36x128xbf16, #tpu.memory_space<vmem>>, vector<1x128xbf16>,
    %c1 = arith.constant 1 : index
    %c0_9 = arith.constant 0 : index
    %14 = vector.load %arg7[%c1, %c0_9] : memref<36x128xbf16, #tpu.memory_space<vmem>>, vector<16x128xbf16>
    tpu.vector_store %arg7[%c1, %c0_9], %11 {strides = array<i32>} : memref<36x128xbf16, #tpu.memory_space<vmem>>, vector<16x128xbf16>,
    %cst_10 = arith.constant 0.000000e+00 : bf16
    %15 = vector.broadcast %cst_10 : bf16 to vector<1x128xbf16>
    %c17 = arith.constant 17 : index
    %c0_11 = arith.constant 0 : index
    %16 = vector.load %arg7[%c17, %c0_11] : memref<36x128xbf16, #tpu.memory_space<vmem>>, vector<1x128xbf16>
    tpu.vector_store %arg7[%c17, %c0_11], %15 {strides = array<i32>} : memref<36x128xbf16, #tpu.memory_space<vmem>>, vector<1x128xbf16>,
    %c1_12 = arith.constant 1 : index
    %c0_13 = arith.constant 0 : index
    %c0_14 = arith.constant 0 : index
    %17 = vector.load %arg1[%c1_12, %c0_13, %c0_14] : memref<2x16x128xbf16, #tpu.memory_space<vmem>>, vector<1x16x128xbf16>
    %18 = vector.shape_cast %17 : vector<1x16x128xbf16> to vector<16x128xbf16>
    %19 = arith.extf %18 : vector<16x128xbf16> to vector<16x128xf32>
    %c0_15 = arith.constant 0 : index
    %c0_16 = arith.constant 0 : index
    %20 = vector.load %arg2[%c0_15, %c0_16] : memref<1x128xf32, #tpu.memory_space<vmem>>, vector<1x128xf32>
    %21 = vector.broadcast %20 : vector<1x128xf32> to vector<16x128xf32>
    %22 = arith.mulf %19, %21 : vector<16x128xf32>
    %c0_17 = arith.constant 0 : index
    %c0_18 = arith.constant 0 : index
    %23 = vector.load %arg3[%c0_17, %c0_18] : memref<1x128xf32, #tpu.memory_space<vmem>>, vector<1x128xf32>
    %24 = vector.broadcast %23 : vector<1x128xf32> to vector<16x128xf32>
    %25 = arith.addf %22, %24 : vector<16x128xf32>
    %cst_19 = arith.constant 0.000000e+00 : f32
    %26 = vector.broadcast %cst_19 : f32 to vector<16x128xf32>
    %27 = arith.maximumf %25, %26 : vector<16x128xf32>
    %28 = arith.truncf %27 : vector<16x128xf32> to vector<16x128xbf16>
    %cst_20 = arith.constant 0.000000e+00 : bf16
    %29 = vector.broadcast %cst_20 : bf16 to vector<1x128xbf16>
    %c18 = arith.constant 18 : index
    %c0_21 = arith.constant 0 : index
    %30 = vector.load %arg7[%c18, %c0_21] : memref<36x128xbf16, #tpu.memory_space<vmem>>, vector<1x128xbf16>
    tpu.vector_store %arg7[%c18, %c0_21], %29 {strides = array<i32>} : memref<36x128xbf16, #tpu.memory_space<vmem>>, vector<1x128xbf16>,
    %c19 = arith.constant 19 : index
    %c0_22 = arith.constant 0 : index
    %31 = vector.load %arg7[%c19, %c0_22] : memref<36x128xbf16, #tpu.memory_space<vmem>>, vector<16x128xbf16>
    tpu.vector_store %arg7[%c19, %c0_22], %28 {strides = array<i32>} : memref<36x128xbf16, #tpu.memory_space<vmem>>, vector<16x128xbf16>,
    %cst_23 = arith.constant 0.000000e+00 : bf16
    %32 = vector.broadcast %cst_23 : bf16 to vector<1x128xbf16>
    %c35 = arith.constant 35 : index
    %c0_24 = arith.constant 0 : index
    %33 = vector.load %arg7[%c35, %c0_24] : memref<36x128xbf16, #tpu.memory_space<vmem>>, vector<1x128xbf16>
    tpu.vector_store %arg7[%c35, %c0_24], %32 {strides = array<i32>} : memref<36x128xbf16, #tpu.memory_space<vmem>>, vector<1x128xbf16>,
    %c0_25 = arith.constant 0 : index
    %c0_26 = arith.constant 0 : index
    %34 = vector.load %arg7[%c0_25, %c0_26] : memref<36x128xbf16, #tpu.memory_space<vmem>>, vector<34x128xbf16>
    %c0_27 = arith.constant 0 : index
    %c0_28 = arith.constant 0 : index
    %c0_29 = arith.constant 0 : index
    %35 = vector.load %arg4[%c0_27, %c0_28, %c0_29] : memref<3x128x128xbf16, #tpu.memory_space<vmem>>, vector<1x128x128xbf16>
    %36 = vector.shape_cast %35 : vector<1x128x128xbf16> to vector<128x128xbf16>
    %cst_30 = arith.constant dense<0.000000e+00> : vector<34x128xf32>
    %37 = tpu.matmul %34, %36, %cst_30 {dimension_numbers = #tpu.dot_dimension_numbers<[1], [0], [0], [1], [0, 0, 1, 1], [], []>} : vector<34x128xbf16>, vector<128x128xbf16>, vector<34x128xf32> -> vector<34x128xf32>
    %c1_31 = arith.constant 1 : index
    %c0_32 = arith.constant 0 : index
    %38 = vector.load %arg7[%c1_31, %c0_32] : memref<36x128xbf16, #tpu.memory_space<vmem>>, vector<34x128xbf16>
    %c1_33 = arith.constant 1 : index
    %c0_34 = arith.constant 0 : index
    %c0_35 = arith.constant 0 : index
    %39 = vector.load %arg4[%c1_33, %c0_34, %c0_35] : memref<3x128x128xbf16, #tpu.memory_space<vmem>>, vector<1x128x128xbf16>
    %40 = vector.shape_cast %39 : vector<1x128x128xbf16> to vector<128x128xbf16>
    %cst_36 = arith.constant dense<0.000000e+00> : vector<34x128xf32>
    %41 = tpu.matmul %38, %40, %cst_36 {dimension_numbers = #tpu.dot_dimension_numbers<[1], [0], [0], [1], [0, 0, 1, 1], [], []>} : vector<34x128xbf16>, vector<128x128xbf16>, vector<34x128xf32> -> vector<34x128xf32>
    %42 = arith.addf %37, %41 : vector<34x128xf32>
    %c2 = arith.constant 2 : index
    %c0_37 = arith.constant 0 : index
    %43 = vector.load %arg7[%c2, %c0_37] : memref<36x128xbf16, #tpu.memory_space<vmem>>, vector<34x128xbf16>
    %c2_38 = arith.constant 2 : index
    %c0_39 = arith.constant 0 : index
    %c0_40 = arith.constant 0 : index
    %44 = vector.load %arg4[%c2_38, %c0_39, %c0_40] : memref<3x128x128xbf16, #tpu.memory_space<vmem>>, vector<1x128x128xbf16>
    %45 = vector.shape_cast %44 : vector<1x128x128xbf16> to vector<128x128xbf16>
    %cst_41 = arith.constant dense<0.000000e+00> : vector<34x128xf32>
    %46 = tpu.matmul %43, %45, %cst_41 {dimension_numbers = #tpu.dot_dimension_numbers<[1], [0], [0], [1], [0, 0, 1, 1], [], []>} : vector<34x128xbf16>, vector<128x128xbf16>, vector<34x128xf32> -> vector<34x128xf32>
    %47 = arith.addf %42, %46 : vector<34x128xf32>
    %cst_42 = arith.constant 0.000000e+00 : f32
    %48 = vector.broadcast %cst_42 : f32 to vector<1x128xf32>
    %cst_43 = arith.constant 0.000000e+00 : f32
    %49 = vector.broadcast %cst_43 : f32 to vector<1x128xf32>
    %50 = vector.extract_strided_slice %47 {offsets = [0, 0], sizes = [16, 128], strides = [1, 1]} : vector<34x128xf32> to vector<16x128xf32>
    %51 = arith.truncf %50 : vector<16x128xf32> to vector<16x128xbf16>
    %c0_44 = arith.constant 0 : index
    %c0_45 = arith.constant 0 : index
    %c0_46 = arith.constant 0 : index
    %52 = vector.load %arg5[%c0_44, %c0_45, %c0_46] : memref<2x16x128xbf16, #tpu.memory_space<vmem>>, vector<1x16x128xbf16>
    %53 = vector.shape_cast %52 : vector<1x16x128xbf16> to vector<16x128xbf16>
    %54 = vector.shape_cast %51 : vector<16x128xbf16> to vector<1x16x128xbf16>
    tpu.vector_store %arg5[%c0_44, %c0_45, %c0_46], %54 {strides = array<i32>} : memref<2x16x128xbf16, #tpu.memory_space<vmem>>, vector<1x16x128xbf16>,
    %cst_47 = arith.constant dense<0.000000e+00> : vector<128xf32>
    %55 = vector.multi_reduction <add>, %50, %cst_47 [0] : vector<16x128xf32> to vector<128xf32>
    %56 = vector.shape_cast %55 : vector<128xf32> to vector<1x128xf32>
    %57 = arith.addf %48, %56 : vector<1x128xf32>
    %58 = arith.mulf %50, %50 : vector<16x128xf32>
    %cst_48 = arith.constant dense<0.000000e+00> : vector<128xf32>
    %59 = vector.multi_reduction <add>, %58, %cst_48 [0] : vector<16x128xf32> to vector<128xf32>
    %60 = vector.shape_cast %59 : vector<128xf32> to vector<1x128xf32>
    %61 = arith.addf %49, %60 : vector<1x128xf32>
    %62 = vector.extract_strided_slice %47 {offsets = [18, 0], sizes = [16, 128], strides = [1, 1]} : vector<34x128xf32> to vector<16x128xf32>
    %63 = arith.truncf %62 : vector<16x128xf32> to vector<16x128xbf16>
    %c1_49 = arith.constant 1 : index
    %c0_50 = arith.constant 0 : index
    %c0_51 = arith.constant 0 : index
    %64 = vector.load %arg5[%c1_49, %c0_50, %c0_51] : memref<2x16x128xbf16, #tpu.memory_space<vmem>>, vector<1x16x128xbf16>
    %65 = vector.shape_cast %64 : vector<1x16x128xbf16> to vector<16x128xbf16>
    %66 = vector.shape_cast %63 : vector<16x128xbf16> to vector<1x16x128xbf16>
    tpu.vector_store %arg5[%c1_49, %c0_50, %c0_51], %66 {strides = array<i32>} : memref<2x16x128xbf16, #tpu.memory_space<vmem>>, vector<1x16x128xbf16>,
    %cst_52 = arith.constant dense<0.000000e+00> : vector<128xf32>
    %67 = vector.multi_reduction <add>, %62, %cst_52 [0] : vector<16x128xf32> to vector<128xf32>
    %68 = vector.shape_cast %67 : vector<128xf32> to vector<1x128xf32>
    %69 = arith.addf %57, %68 : vector<1x128xf32>
    %70 = arith.mulf %62, %62 : vector<16x128xf32>
    %cst_53 = arith.constant dense<0.000000e+00> : vector<128xf32>
    %71 = vector.multi_reduction <add>, %70, %cst_53 [0] : vector<16x128xf32> to vector<128xf32>
    %72 = vector.shape_cast %71 : vector<128xf32> to vector<1x128xf32>
    %73 = arith.addf %61, %72 : vector<1x128xf32>
    %c0_54 = arith.constant 0 : index
    %c0_55 = arith.constant 0 : index
    %c0_56 = arith.constant 0 : index
    %74 = vector.load %arg6[%c0_54, %c0_55, %c0_56] : memref<1x2x128xf32, #tpu.memory_space<vmem>>, vector<1x1x128xf32>
    %75 = vector.shape_cast %74 : vector<1x1x128xf32> to vector<1x128xf32>
    %76 = vector.shape_cast %69 : vector<1x128xf32> to vector<1x1x128xf32>
    tpu.vector_store %arg6[%c0_54, %c0_55, %c0_56], %76 {strides = array<i32>} : memref<1x2x128xf32, #tpu.memory_space<vmem>>, vector<1x1x128xf32>,
    %c0_57 = arith.constant 0 : index
    %c1_58 = arith.constant 1 : index
    %c0_59 = arith.constant 0 : index
    %77 = vector.load %arg6[%c0_57, %c1_58, %c0_59] : memref<1x2x128xf32, #tpu.memory_space<vmem>>, vector<1x1x128xf32>
    %78 = vector.shape_cast %77 : vector<1x1x128xf32> to vector<1x128xf32>
    %79 = vector.shape_cast %73 : vector<1x128xf32> to vector<1x1x128xf32>
    tpu.vector_store %arg6[%c0_57, %c1_58, %c0_59], %79 {strides = array<i32>} : memref<1x2x128xf32, #tpu.memory_space<vmem>>, vector<1x1x128xf32>,
    return
  }
  func.func @transform_0(%arg0: i32) -> (i32, i32, i32) {
    %c0_i32 = arith.constant 0 : i32
    %c0_i32_0 = arith.constant 0 : i32
    %c0_i32_1 = arith.constant 0 : i32
    return %arg0, %c0_i32, %c0_i32_0 : i32, i32, i32
  }
  func.func @transform_1(%arg0: i32) -> (i32, i32) {
    %c0_i32 = arith.constant 0 : i32
    %c0_i32_0 = arith.constant 0 : i32
    %c0_i32_1 = arith.constant 0 : i32
    return %c0_i32, %c0_i32_0 : i32, i32
  }
  func.func @transform_2(%arg0: i32) -> (i32, i32) {
    %c0_i32 = arith.constant 0 : i32
    %c0_i32_0 = arith.constant 0 : i32
    %c0_i32_1 = arith.constant 0 : i32
    return %c0_i32, %c0_i32_0 : i32, i32
  }
  func.func @transform_3(%arg0: i32) -> (i32, i32, i32) {
    %c0_i32 = arith.constant 0 : i32
    %c0_i32_0 = arith.constant 0 : i32
    %c0_i32_1 = arith.constant 0 : i32
    %c0_i32_2 = arith.constant 0 : i32
    return %c0_i32, %c0_i32_0, %c0_i32_1 : i32, i32, i32
  }
  func.func @transform_4(%arg0: i32) -> (i32, i32, i32) {
    %c0_i32 = arith.constant 0 : i32
    %c0_i32_0 = arith.constant 0 : i32
    %c0_i32_1 = arith.constant 0 : i32
    return %arg0, %c0_i32, %c0_i32_0 : i32, i32, i32
  }
  func.func @transform_5(%arg0: i32) -> (i32, i32, i32) {
    %c0_i32 = arith.constant 0 : i32
    %c0_i32_0 = arith.constant 0 : i32
    %c0_i32_1 = arith.constant 0 : i32
    return %arg0, %c0_i32, %c0_i32_0 : i32, i32, i32
  }
}

module attributes {stable_mosaic.version = 11 : i64} {
  func.func @kernel_c(%arg0: i32, %arg1: memref<32x128xbf16, #tpu.memory_space<vmem>>, %arg2: memref<1x128xf32, #tpu.memory_space<vmem>>, %arg3: memref<1x128xf32, #tpu.memory_space<vmem>>, %arg4: memref<32x128xf32, #tpu.memory_space<vmem>>, %arg5: memref<32x128xf32, #tpu.memory_space<vmem>>) attributes {dimension_semantics = [#tpu.dimension_semantics<parallel>], iteration_bounds = array<i64: 1>, scalar_prefetch = 0 : i64, scratch_operands = 0 : i64, tpu.core_type = #tpu.core_type<tc>, window_params = [{transform_indices = @transform_0, window_bounds = array<i64: 32, 128>}, {pipeline_mode = #tpu.pipeline_mode<synchronous>, transform_indices = @transform_1, window_bounds = array<i64: 1, 128>}, {pipeline_mode = #tpu.pipeline_mode<synchronous>, transform_indices = @transform_2, window_bounds = array<i64: 1, 128>}, {transform_indices = @transform_3, window_bounds = array<i64: 32, 128>}, {transform_indices = @transform_4, window_bounds = array<i64: 32, 128>}]} {
    %c0 = arith.constant 0 : index
    %c0_0 = arith.constant 0 : index
    %0 = vector.load %arg1[%c0, %c0_0] : memref<32x128xbf16, #tpu.memory_space<vmem>>, vector<32x128xbf16>
    %1 = arith.extf %0 : vector<32x128xbf16> to vector<32x128xf32>
    %c0_1 = arith.constant 0 : index
    %c0_2 = arith.constant 0 : index
    %2 = vector.load %arg2[%c0_1, %c0_2] : memref<1x128xf32, #tpu.memory_space<vmem>>, vector<1x128xf32>
    %3 = vector.broadcast %2 : vector<1x128xf32> to vector<32x128xf32>
    %4 = arith.mulf %1, %3 : vector<32x128xf32>
    %c0_3 = arith.constant 0 : index
    %c0_4 = arith.constant 0 : index
    %5 = vector.load %arg3[%c0_3, %c0_4] : memref<1x128xf32, #tpu.memory_space<vmem>>, vector<1x128xf32>
    %6 = vector.broadcast %5 : vector<1x128xf32> to vector<32x128xf32>
    %7 = arith.addf %4, %6 : vector<32x128xf32>
    %c0_5 = arith.constant 0 : index
    %c0_6 = arith.constant 0 : index
    %8 = vector.load %arg4[%c0_5, %c0_6] : memref<32x128xf32, #tpu.memory_space<vmem>>, vector<32x128xf32>
    %9 = arith.addf %7, %8 : vector<32x128xf32>
    %cst = arith.constant 0.000000e+00 : f32
    %10 = vector.broadcast %cst : f32 to vector<32x128xf32>
    %11 = arith.maximumf %9, %10 : vector<32x128xf32>
    %c0_7 = arith.constant 0 : index
    %c0_8 = arith.constant 0 : index
    %12 = vector.load %arg5[%c0_7, %c0_8] : memref<32x128xf32, #tpu.memory_space<vmem>>, vector<32x128xf32>
    tpu.vector_store %arg5[%c0_7, %c0_8], %11 {strides = array<i32>} : memref<32x128xf32, #tpu.memory_space<vmem>>, vector<32x128xf32>,
    return
  }
  func.func @transform_0(%arg0: i32) -> (i32, i32) {
    %c0_i32 = arith.constant 0 : i32
    %c0_i32_0 = arith.constant 0 : i32
    return %arg0, %c0_i32 : i32, i32
  }
  func.func @transform_1(%arg0: i32) -> (i32, i32) {
    %c0_i32 = arith.constant 0 : i32
    %c0_i32_0 = arith.constant 0 : i32
    %c0_i32_1 = arith.constant 0 : i32
    return %c0_i32, %c0_i32_0 : i32, i32
  }
  func.func @transform_2(%arg0: i32) -> (i32, i32) {
    %c0_i32 = arith.constant 0 : i32
    %c0_i32_0 = arith.constant 0 : i32
    %c0_i32_1 = arith.constant 0 : i32
    return %c0_i32, %c0_i32_0 : i32, i32
  }
  func.func @transform_3(%arg0: i32) -> (i32, i32) {
    %c0_i32 = arith.constant 0 : i32
    %c0_i32_0 = arith.constant 0 : i32
    return %arg0, %c0_i32 : i32, i32
  }
  func.func @transform_4(%arg0: i32) -> (i32, i32) {
    %c0_i32 = arith.constant 0 : i32
    %c0_i32_0 = arith.constant 0 : i32
    return %arg0, %c0_i32 : i32, i32
  }
}

</mosaic_0001>

<llo_original>
// kernel: tile.23
$region0: #{tile.23}
  #allocation0 [shape = 's32[1]{0}', space=sflag, size = 0x4, scoped, tag = 'scoped memory for tile.23']
  %s0 = inlined_call_operand.vmem [shape: f32[8], index: 0, kind: input, shape index: {}]
  %s1 = inlined_call_operand.vmem [shape: f32[16,8], index: 1, kind: output, shape index: {}]
  // Predicated region
  $region2: #{tile.23} parent=0 // pred_check
    _
  $region3: #{tile.23} parent=0 // pred_check_branch
    %3 = sbr.rel (0) target = $region5
  $region4: #{tile.23} parent=0 // pred_region
    _
  $region5: #{tile.23} parent=0 // pred_fallthru
    _
  %v4 = vld [vmem:[%s0] ss:$0 sm:$0xff]
  %5 = vst [vmem:[%s1] sm:$0xff] %v4
  %s6 = scalar_lea.vmem %s1, 8
  %7 = vst [vmem:[%s6] sm:$0xff] %v4

// kernel: tile.24
$region0: #{tile.24}
  %s0 = inlined_call_operand.vmem [shape: f32[16,8], index: 0, kind: input, shape index: {}]
  %s1 = inlined_call_operand.vmem [shape: f32[1,128], index: 1, kind: output, shape index: {}]
  $region1: #{tile.24} parent=0
    #allocation0 [shape = 'u8[4096]{0}', space=vmem, size = 0x1000, scoped, tag = 'scoped mem for output reshape']
    %v2 = vld [vmem:[%s0] sm:$0x1]
    %vm3 = vcmask 64512
    %4 = vst.msk [vmem:[#allocation0] sm:$0x1] %vm3, %v2
    %s5 = scalar_lea.vmem %s0, 15
    %v6 = vld [vmem:[%s5] sm:$0x1]
    %7 = vrot.lane.b32.xlu0 %v6, 120
    %v8 = vpop.permute.xlu0 %7
    %vm9 = vcmask 1048512
    %10 = vst.msk [vmem:[#allocation0] sm:$0x1] %vm9, %v8
    %s11 = scalar_lea.vmem %s0, 14
    %v12 = vld [vmem:[%s11] sm:$0x1]
    %13 = vrot.lane.b32.xlu0 %v12, 112
    %v14 = vpop.permute.xlu0 %13
    %vm15 = vcmask 982912
    %16 = vst.msk [vmem:[#allocation0] sm:$0x1] %vm15, %v14
    %s17 = scalar_lea.vmem %s0, 13
    %v18 = vld [vmem:[%s17] sm:$0x1]
    %19 = vrot.lane.b32.xlu0 %v18, 104
    %v20 = vpop.permute.xlu0 %19
    %vm21 = vcmask 917312
    %22 = vst.msk [vmem:[#allocation0] sm:$0x1] %vm21, %v20
    %s23 = scalar_lea.vmem %s0, 12
    %v24 = vld [vmem:[%s23] sm:$0x1]
    %25 = vrot.lane.b32.xlu0 %v24, 96
    %v26 = vpop.permute.xlu0 %25
    %vm27 = vcmask 851712
    %28 = vst.msk [vmem:[#allocation0] sm:$0x1] %vm27, %v26
    %s29 = scalar_lea.vmem %s0, 11
    %v30 = vld [vmem:[%s29] sm:$0x1]
    %31 = vrot.lane.b32.xlu0 %v30, 88
    %v32 = vpop.permute.xlu0 %31
    %vm33 = vcmask 786112
    %34 = vst.msk [vmem:[#allocation0] sm:$0x1] %vm33, %v32
    %s35 = scalar_lea.vmem %s0, 10
    %v36 = vld [vmem:[%s35] sm:$0x1]
    %37 = vrot.lane.b32.xlu0 %v36, 80
    %v38 = vpop.permute.xlu0 %37
    %vm39 = vcmask 720512
    %40 = vst.msk [vmem:[#allocation0] sm:$0x1] %vm39, %v38
    %s41 = scalar_lea.vmem %s0, 9
    %v42 = vld [vmem:[%s41] sm:$0x1]
    %43 = vrot.lane.b32.xlu0 %v42, 72
    %v44 = vpop.permute.xlu0 %43
    %vm45 = vcmask 654912
    %46 = vst.msk [vmem:[#allocation0] sm:$0x1] %vm45, %v44
    %s47 = scalar_lea.vmem %s0, 8
    %v48 = vld [vmem:[%s47] sm:$0x1]
    %49 = vrot.lane.b32.xlu0 %v48, 64
    %v50 = vpop.permute.xlu0 %49
    %vm51 = vcmask 589312
    %52 = vst.msk [vmem:[#allocation0] sm:$0x1] %vm51, %v50
    %s53 = scalar_lea.vmem %s0, 7
    %v54 = vld [vmem:[%s53] sm:$0x1]
    %55 = vrot.lane.b32.xlu0 %v54, 56
    %v56 = vpop.permute.xlu0 %55
    %vm57 = vcmask 523712
    %58 = vst.msk [vmem:[#allocation0] sm:$0x1] %vm57, %v56
    %s59 = scalar_lea.vmem %s0, 6
    %v60 = vld [vmem:[%s59] sm:$0x1]
    %61 = vrot.lane.b32.xlu0 %v60, 48
    %v62 = vpop.permute.xlu0 %61
    %vm63 = vcmask 458112
    %64 = vst.msk [vmem:[#allocation0] sm:$0x1] %vm63, %v62
    %s65 = scalar_lea.vmem %s0, 5
    %v66 = vld [vmem:[%s65] sm:$0x1]
    %67 = vrot.lane.b32.xlu0 %v66, 40
    %v68 = vpop.permute.xlu0 %67
    %vm69 = vcmask 392512
    %70 = vst.msk [vmem:[#allocation0] sm:$0x1] %vm69, %v68
    %s71 = scalar_lea.vmem %s0, 4
    %v72 = vld [vmem:[%s71] sm:$0x1]
    %73 = vrot.lane.b32.xlu0 %v72, 32
    %v74 = vpop.permute.xlu0 %73
    %vm75 = vcmask 326912
    %76 = vst.msk [vmem:[#allocation0] sm:$0x1] %vm75, %v74
    %s77 = scalar_lea.vmem %s0, 3
    %v78 = vld [vmem:[%s77] sm:$0x1]
    %79 = vrot.lane.b32.xlu0 %v78, 24
    %v80 = vpop.permute.xlu0 %79
    %vm81 = vcmask 261312
    %82 = vst.msk [vmem:[#allocation0] sm:$0x1] %vm81, %v80
    %s83 = scalar_lea.vmem %s0, 2
    %v84 = vld [vmem:[%s83] sm:$0x1]
    %85 = vrot.lane.b32.xlu0 %v84, 16
    %v86 = vpop.permute.xlu0 %85
    %vm87 = vcmask 195712
    %88 = vst.msk [vmem:[#allocation0] sm:$0x1] %vm87, %v86
    %s89 = scalar_lea.vmem %s0, 1
    %v90 = vld [vmem:[%s89] sm:$0x1]
    %91 = vrot.lane.b32.xlu0 %v90, 8
    %v92 = vpop.permute.xlu0 %91
    %vm93 = vcmask 130112
    %94 = vst.msk [vmem:[#allocation0] sm:$0x1] %vm93, %v92
    %s96 = sshll.u32 1, 1
    %s97 = ssub.s32 %s96, 1
    %v99 = vld [vmem:[#allocation0] sm:%s97]
    %s100 = sshll.u32 1, 1
    %s101 = ssub.s32 %s100, 1
    %102 = vst [vmem:[%s1] sm:%s101] %v99

// kernel: basic_block_forward.3
$region0: #{basic_block_forward.3}
  #allocation0 [shape = 'u32[]', space=smem, size = 0x4, offset = 0x4, fixed_abs, tag = 'smem constant byte address 0x4 - core index']
  #allocation1 [shape = 'u32[144,128]{1,0:T(1,128)}', space=vmem, size = 0x12000, scoped, tag = 'internal scratch']
  #allocation2 [shape = 'bf16[36,128]{1,0:T(8,128)(2,1)}', space=vmem, size = 0x2800, scoped, tag = 'scratch operand']
  %s0 = inlined_call_operand.vmem [shape: bf16[2,16,128], index: 0, kind: input, shape index: {}]
  %s1 = inlined_call_operand.vmem [shape: bf16[3,128,128], index: 1, kind: input, shape index: {}]
  %s2 = inlined_call_operand.vmem [shape: bf16[2,16,128], index: 2, kind: output, shape index: {0}]
  %s3 = inlined_call_operand.vmem [shape: f32[1,2,128], index: 3, kind: output, shape index: {1}]
  %4 = xla_tuple %s2, %s3
  %s5 = sld [smem:[#allocation0]]
  $region26: #{basic_block_forward.3} parent=0
    _
  %s7 = ssub.s32 1, %s5
  %s8 = scalar_select 0, %s7, %s5
  // Predicated region
  $region2: #{basic_block_forward.3} parent=0 // pred_check
    _
  $region3: #{basic_block_forward.3} parent=0 // pred_check_branch
    %10 = sbr.rel (0) target = $region5
  $region4: #{basic_block_forward.3} parent=0 // pred_region
    _
  $region5: #{basic_block_forward.3} parent=0 // pred_fallthru
    _
  // Predicated region
  $region6: #{basic_block_forward.3} parent=0 // pred_check
    _
  $region7: #{basic_block_forward.3} parent=0 // pred_check_branch
    %12 = sbr.rel (0) target = $region9
  $region8: #{basic_block_forward.3} parent=0 // pred_region
    _
  $region9: #{basic_block_forward.3} parent=0 // pred_fallthru
    _
  %v14 = vld [vmem:[%s0] sm:$0xf]
  %v15 = vld [vmem:[%s0 + $0x4] sm:$0xf]
  %vm16 = vcmask 1040384
  %vm17 = vsmask.f32 256
  %vm18 = vmand %vm16, %vm17
  %v19 = vld [vmem:[#allocation2] sm:$0x1]
  %v20 = vsel %vm18, 0, %v19
  %21 = vst [vmem:[#allocation2] sm:$0x1] %v20
  %vm22 = vsmask.f32 4368
  %vm23 = vmor %vm17, %vm22
  %v25 = vshrl.u32 %v14, 16
  %v27 = vrot.slane %v25, 7
  %v28 = vshll.u32 %v14, 16
  %v30 = vor.u32 %v27, %v28
  %v31 = vrot.slane %v27, 4
  %v33 = vshrl.u32 %v15, 16
  %v35 = vrot.slane %v33, 7
  %v36 = vshll.u32 %v15, 16
  %v38 = vor.u32 %v35, %v36
  %v39 = vsel %vm23, %v31, %v38
  %v40 = vrot.slane %v35, 4
  %vm44 = vcmask 1043456
  %vm45 = vsmask.f32 7938
  %vm46 = vmand %vm44, %vm45
  %v47 = vld [vmem:[#allocation2] sm:$0xf]
  %v48 = vsel %vm46, %v30, %v47
  %49 = vst [vmem:[#allocation2] sm:$0xf] %v48
  %50 = vst [vmem:[#allocation2 + $0x4] sm:$0xf] %v39
  %v51 = vld [vmem:[#allocation2 + $0x8] sm:$0x1]
  %v52 = vsel %vm18, %v40, %v51
  %53 = vst [vmem:[#allocation2 + $0x8] sm:$0x1] %v52
  %vm54 = vmand %vm16, %vm45
  %v55 = vld [vmem:[#allocation2 + $0x8] sm:$0x1]
  %v56 = vsel %vm54, 0, %v55
  %57 = vst [vmem:[#allocation2 + $0x8] sm:$0x1] %v56
  %s58 = scalar_lea.vmem %s0, 8
  %v59 = vld [vmem:[%s58] sm:$0xf]
  %v60 = vld [vmem:[%s58 + $0x4] sm:$0xf]
  %vm61 = vcmask 1041409
  %vm62 = vsmask.f32 1280
  %vm63 = vmand %vm61, %vm62
  %v64 = vld [vmem:[#allocation2 + $0x8] sm:$0x2]
  %v65 = vsel %vm63, 0, %v64
  %66 = vst [vmem:[#allocation2 + $0x8] sm:$0x2] %v65
  %vm67 = vsmask.f32 5392
  %vm68 = vmor %vm62, %vm67
  %v70 = vshrl.u32 %v59, 16
  %v72 = vrot.slane %v70, 6
  %v73 = vshll.u32 %v59, 16
  %v75 = vrot.slane %v73, 7
  %v76 = vor.u32 %v72, %v75
  %v77 = vrot.slane %v76, 4
  %v79 = vshrl.u32 %v60, 16
  %v81 = vrot.slane %v79, 6
  %v82 = vshll.u32 %v60, 16
  %v84 = vrot.slane %v82, 7
  %v85 = vor.u32 %v81, %v84
  %v86 = vsel %vm68, %v77, %v85
  %v87 = vrot.slane %v85, 4
  %vm91 = vcmask 1043457
  %vm92 = vsmask.f32 7942
  %vm93 = vmand %vm91, %vm92
  %v94 = vld [vmem:[#allocation2 + $0x8] sm:$0xe]
  %v95 = vsel %vm93, %v76, %v94
  %96 = vst [vmem:[#allocation2 + $0x8] sm:$0xe] %v95
  %97 = vst [vmem:[#allocation2 + $0xc] sm:$0xf] %v86
  %vm98 = vcmask 1041408
  %vm99 = vmand %vm98, %vm62
  %v100 = vld [vmem:[#allocation2 + $0x10] sm:$0x3]
  %v101 = vsel %vm99, %v87, %v100
  %102 = vst [vmem:[#allocation2 + $0x10] sm:$0x3] %v101
  %vm103 = vmand %vm61, %vm92
  %v104 = vld [vmem:[#allocation2 + $0x10] sm:$0x2]
  %v105 = vsel %vm103, 0, %v104
  %106 = vst [vmem:[#allocation2 + $0x10] sm:$0x2] %v105
  %v107 = vld [vmem:[#allocation2] sm:$0xf]
  %v108 = vld [vmem:[#allocation2 + $0x4] sm:$0xf]
  %v109 = vld [vmem:[#allocation2 + $0x8] sm:$0xf]
  %v110 = vld [vmem:[#allocation2 + $0xc] sm:$0xf]
  %v111 = vld [vmem:[#allocation2 + $0x10] sm:$0x1]
  %v112 = vld [vmem:[%s1] sm:$0xf]
  %v113 = vld [vmem:[%s1 + $0x4] sm:$0xf]
  %v114 = vld [vmem:[%s1 + $0x8] sm:$0xf]
  %v115 = vld [vmem:[%s1 + $0xc] sm:$0xf]
  %v116 = vld [vmem:[%s1 + $0x10] sm:$0xf]
  %v117 = vld [vmem:[%s1 + $0x14] sm:$0xf]
  %v118 = vld [vmem:[%s1 + $0x18] sm:$0xf]
  %v119 = vld [vmem:[%s1 + $0x1c] sm:$0xf]
  %v120 = vld [vmem:[%s1 + $0x20] sm:$0xf]
  %v121 = vld [vmem:[%s1 + $0x24] sm:$0xf]
  %v122 = vld [vmem:[%s1 + $0x28] sm:$0xf]
  %v123 = vld [vmem:[%s1 + $0x2c] sm:$0xf]
  %v124 = vld [vmem:[%s1 + $0x30] sm:$0xf]
  %v125 = vld [vmem:[%s1 + $0x34] sm:$0xf]
  %v126 = vld [vmem:[%s1 + $0x38] sm:$0xf]
  %v127 = vld [vmem:[%s1 + $0x3c] sm:$0xf]
  %v128 = vld [vmem:[#allocation2 + $0x10] sm:$0x3]
  %s129 = scalar_lea.vmem %s1, 64
  %v130 = vld [vmem:[%s129] sm:$0xf]
  %v131 = vld [vmem:[%s129 + $0x4] sm:$0xf]
  %v132 = vld [vmem:[%s129 + $0x8] sm:$0xf]
  %v133 = vld [vmem:[%s129 + $0xc] sm:$0xf]
  %v134 = vld [vmem:[%s129 + $0x10] sm:$0xf]
  %v135 = vld [vmem:[%s129 + $0x14] sm:$0xf]
  %v136 = vld [vmem:[%s129 + $0x18] sm:$0xf]
  %v137 = vld [vmem:[%s129 + $0x1c] sm:$0xf]
  %v138 = vld [vmem:[%s129 + $0x20] sm:$0xf]
  %v139 = vld [vmem:[%s129 + $0x24] sm:$0xf]
  %v140 = vld [vmem:[%s129 + $0x28] sm:$0xf]
  %v141 = vld [vmem:[%s129 + $0x2c] sm:$0xf]
  %v142 = vld [vmem:[%s129 + $0x30] sm:$0xf]
  %v143 = vld [vmem:[%s129 + $0x34] sm:$0xf]
  %v144 = vld [vmem:[%s129 + $0x38] sm:$0xf]
  %v145 = vld [vmem:[%s129 + $0x3c] sm:$0xf]
  %v151 = vunpack.c.l.b16 %v107
  %v152 = vunpack.c.l.b16 %v108
  %v153 = vunpack.c.l.b16 %v109
  %v154 = vunpack.c.l.b16 %v110
  %v155 = vunpack.c.l.b16 %v128
  %v156 = vpack.c.b16 %v152, %v151
  %v157 = vpack.c.b16 %v154, %v153
  %v158 = vpack.c.b16 %v155, %v155
  %vm159 = vsmask.f32 7424
  %v161 = vshrl.u32 %v156, 16
  %v163 = vshll.u32 %v156, 16
  %v165 = vrot.slane %v163, 1
  %v166 = vor.u32 %v161, %v165
  %v168 = vshll.u32 %v157, 16
  %v170 = vrot.slane %v168, 1
  %v171 = vsel %vm159, %v166, %v170
  %v172 = vshrl.u32 %v157, 16
  %v174 = vor.u32 %v172, %v170
  %v176 = vshll.u32 %v158, 16
  %v178 = vrot.slane %v176, 1
  %v179 = vsel %vm159, %v174, %v178
  %v180 = vshrl.u32 %v158, 16
  %v182 = vor.u32 %v180, %v178
  %v202 = vunpack.c.l.b16 %v130
  %v203 = vunpack.c.l.b16 %v131
  %v204 = vunpack.c.l.b16 %v132
  %v205 = vunpack.c.l.b16 %v133
  %v206 = vunpack.c.l.b16 %v134
  %v207 = vunpack.c.l.b16 %v135
  %v208 = vunpack.c.l.b16 %v136
  %v209 = vunpack.c.l.b16 %v137
  %v210 = vunpack.c.l.b16 %v138
  %v211 = vunpack.c.l.b16 %v139
  %v212 = vunpack.c.l.b16 %v140
  %v213 = vunpack.c.l.b16 %v141
  %v214 = vunpack.c.l.b16 %v142
  %v215 = vunpack.c.l.b16 %v143
  %v216 = vunpack.c.l.b16 %v144
  %v217 = vunpack.c.l.b16 %v145
  %v218 = vpack.c.b16 %v203, %v202
  %v219 = vpack.c.b16 %v205, %v204
  %v220 = vpack.c.b16 %v207, %v206
  %v221 = vpack.c.b16 %v209, %v208
  %v222 = vpack.c.b16 %v211, %v210
  %v223 = vpack.c.b16 %v213, %v212
  %v224 = vpack.c.b16 %v215, %v214
  %v225 = vpack.c.b16 %v217, %v216
  %234 = vmatprep.subr.bf16.mxu0 0
  %235 = vmatpush1.bf16.msra.mxu0 %v225
  %236 = vmatprep.subr.bf16.mxu0 0
  %237 = vmatpush1.bf16.msra.mxu0 %v224
  %238 = vmatprep.subr.bf16.mxu0 0
  %239 = vmatpush1.bf16.msra.mxu0 %v223
  %240 = vmatprep.subr.bf16.mxu0 0
  %241 = vmatpush1.bf16.msra.mxu0 %v222
  %242 = vmatprep.subr.bf16.mxu0 0
  %243 = vmatpush1.bf16.msra.mxu0 %v221
  %244 = vmatprep.subr.bf16.mxu0 0
  %245 = vmatpush1.bf16.msra.mxu0 %v220
  %246 = vmatprep.subr.bf16.mxu0 0
  %247 = vmatpush1.bf16.msra.mxu0 %v219
  %248 = vmatprep.subr.bf16.mxu0 0
  %249 = vmatpush1.bf16.msra.mxu0 %v218
  %250 = vmatprep.subr.bf16.mxu0 0
  %251 = vmatpush2.bf16.msra.mxu0 0
  %252 = vmatprep.subr.bf16.mxu0 0
  %253 = vmatpush2.bf16.msra.mxu0 0
  %254 = vmatprep.subr.bf16.mxu0 0
  %255 = vmatpush2.bf16.msra.mxu0 0
  %256 = vmatprep.subr.bf16.mxu0 0
  %257 = vmatpush2.bf16.msra.mxu0 0
  %258 = vmatprep.subr.bf16.mxu0 0
  %259 = vmatpush2.bf16.msra.mxu0 0
  %260 = vmatprep.subr.bf16.mxu0 0
  %261 = vmatpush2.bf16.msra.mxu0 0
  %262 = vmatprep.subr.bf16.mxu0 0
  %263 = vmatpush2.bf16.msra.mxu0 0
  %264 = vmatprep.subr.bf16.mxu0 0
  %265 = vmatpush2.bf16.msra.mxu0 0
  %266 = vmatprep.mubr.bf16.mxu0 0
  %267 = vmatmul.mubr.bf16.gmra.mxu0 %v171
  %v268 = vpop.f32.mrf.mxu0
  %v269 = vadd.f32 0.0, %v268
  %v270 = vpop.f32.mrf.mxu0
  %v271 = vpop.f32.mrf.mxu0
  %v272 = vadd.f32 0.0, %v271
  %v273 = vpop.f32.mrf.mxu0
  %274 = vmatprep.mubr.bf16.mxu0 0
  %275 = vmatmul.mubr.bf16.gmra.mxu0 %v179
  %v276 = vpop.f32.mrf.mxu0
  %v277 = vadd.f32 0.0, %v276
  %v278 = vpop.f32.mrf.mxu0
  %v279 = vpop.f32.mrf.mxu0
  %v280 = vadd.f32 0.0, %v279
  %v281 = vpop.f32.mrf.mxu0
  %282 = vmatprep.mubr.bf16.mxu0 0
  %283 = vmatmul.mubr.bf16.gmra.mxu0 %v182
  %v284 = vpop.f32.mrf.mxu0
  %v285 = vadd.f32 0.0, %v284
  %v286 = vpop.f32.mrf.mxu0
  %v287 = vpop.f32.mrf.mxu0
  %v288 = vpop.f32.mrf.mxu0
  %289 = vdwg.mxu0
  %v291 = vunpack.c.l.b16 %v111
  %v292 = vpack.c.b16 %v291, %v291
  %v312 = vunpack.c.l.b16 %v112
  %v313 = vunpack.c.l.b16 %v113
  %v314 = vunpack.c.l.b16 %v114
  %v315 = vunpack.c.l.b16 %v115
  %v316 = vunpack.c.l.b16 %v116
  %v317 = vunpack.c.l.b16 %v117
  %v318 = vunpack.c.l.b16 %v118
  %v319 = vunpack.c.l.b16 %v119
  %v320 = vunpack.c.l.b16 %v120
  %v321 = vunpack.c.l.b16 %v121
  %v322 = vunpack.c.l.b16 %v122
  %v323 = vunpack.c.l.b16 %v123
  %v324 = vunpack.c.l.b16 %v124
  %v325 = vunpack.c.l.b16 %v125
  %v326 = vunpack.c.l.b16 %v126
  %v327 = vunpack.c.l.b16 %v127
  %v328 = vpack.c.b16 %v313, %v312
  %v329 = vpack.c.b16 %v315, %v314
  %v330 = vpack.c.b16 %v317, %v316
  %v331 = vpack.c.b16 %v319, %v318
  %v332 = vpack.c.b16 %v321, %v320
  %v333 = vpack.c.b16 %v323, %v322
  %v334 = vpack.c.b16 %v325, %v324
  %v335 = vpack.c.b16 %v327, %v326
  %344 = vmatprep.subr.bf16.mxu0 0
  %345 = vmatpush1.bf16.msra.mxu0 %v335
  %346 = vmatprep.subr.bf16.mxu0 0
  %347 = vmatpush1.bf16.msra.mxu0 %v334
  %348 = vmatprep.subr.bf16.mxu0 0
  %349 = vmatpush1.bf16.msra.mxu0 %v333
  %350 = vmatprep.subr.bf16.mxu0 0
  %351 = vmatpush1.bf16.msra.mxu0 %v332
  %352 = vmatprep.subr.bf16.mxu0 0
  %353 = vmatpush1.bf16.msra.mxu0 %v331
  %354 = vmatprep.subr.bf16.mxu0 0
  %355 = vmatpush1.bf16.msra.mxu0 %v330
  %356 = vmatprep.subr.bf16.mxu0 0
  %357 = vmatpush1.bf16.msra.mxu0 %v329
  %358 = vmatprep.subr.bf16.mxu0 0
  %359 = vmatpush1.bf16.msra.mxu0 %v328
  %360 = vmatprep.subr.bf16.mxu0 0
  %361 = vmatpush2.bf16.msra.mxu0 0
  %362 = vmatprep.subr.bf16.mxu0 0
  %363 = vmatpush2.bf16.msra.mxu0 0
  %364 = vmatprep.subr.bf16.mxu0 0
  %365 = vmatpush2.bf16.msra.mxu0 0
  %366 = vmatprep.subr.bf16.mxu0 0
  %367 = vmatpush2.bf16.msra.mxu0 0
  %368 = vmatprep.subr.bf16.mxu0 0
  %369 = vmatpush2.bf16.msra.mxu0 0
  %370 = vmatprep.subr.bf16.mxu0 0
  %371 = vmatpush2.bf16.msra.mxu0 0
  %372 = vmatprep.subr.bf16.mxu0 0
  %373 = vmatpush2.bf16.msra.mxu0 0
  %374 = vmatprep.subr.bf16.mxu0 0
  %375 = vmatpush2.bf16.msra.mxu0 0
  %376 = vmatprep.mubr.bf16.mxu0 0
  %377 = vmatmul.mubr.bf16.gmra.mxu0 %v156
  %v378 = vpop.f32.mrf.mxu0
  %v379 = vadd.f32 %v269, %v378
  %v380 = vpop.f32.mrf.mxu0
  %v381 = vpop.f32.mrf.mxu0
  %v382 = vadd.f32 %v272, %v381
  %v383 = vpop.f32.mrf.mxu0
  %384 = vmatprep.mubr.bf16.mxu0 0
  %385 = vmatmul.mubr.bf16.gmra.mxu0 %v157
  %v386 = vpop.f32.mrf.mxu0
  %v387 = vadd.f32 %v277, %v386
  %v388 = vpop.f32.mrf.mxu0
  %v389 = vpop.f32.mrf.mxu0
  %v390 = vadd.f32 %v280, %v389
  %v391 = vpop.f32.mrf.mxu0
  %392 = vmatprep.mubr.bf16.mxu0 0
  %393 = vmatmul.mubr.bf16.gmra.mxu0 %v292
  %v394 = vpop.f32.mrf.mxu0
  %v395 = vadd.f32 %v285, %v394
  %v396 = vpop.f32.mrf.mxu0
  %v397 = vpop.f32.mrf.mxu0
  %v398 = vpop.f32.mrf.mxu0
  %399 = vdwg.mxu0
  %v400 = vld [vmem:[#allocation2] sm:$0xe]
  %s401 = scalar_lea.vmem %s1, 128
  %v402 = vld [vmem:[%s401] sm:$0xf]
  %v403 = vld [vmem:[%s401 + $0x4] sm:$0xf]
  %v404 = vld [vmem:[%s401 + $0x8] sm:$0xf]
  %v405 = vld [vmem:[%s401 + $0xc] sm:$0xf]
  %v406 = vld [vmem:[%s401 + $0x10] sm:$0xf]
  %v407 = vld [vmem:[%s401 + $0x14] sm:$0xf]
  %v408 = vld [vmem:[%s401 + $0x18] sm:$0xf]
  %v409 = vld [vmem:[%s401 + $0x1c] sm:$0xf]
  %v410 = vld [vmem:[%s401 + $0x20] sm:$0xf]
  %v411 = vld [vmem:[%s401 + $0x24] sm:$0xf]
  %v412 = vld [vmem:[%s401 + $0x28] sm:$0xf]
  %v413 = vld [vmem:[%s401 + $0x2c] sm:$0xf]
  %v414 = vld [vmem:[%s401 + $0x30] sm:$0xf]
  %v415 = vld [vmem:[%s401 + $0x34] sm:$0xf]
  %v416 = vld [vmem:[%s401 + $0x38] sm:$0xf]
  %v417 = vld [vmem:[%s401 + $0x3c] sm:$0xf]
  %v419 = vunpack.c.l.b16 %v400
  %v420 = vpack.c.b16 %v152, %v419
  %vm421 = vcmask 1046528
  %v422 = vrot.slane %v420, 1
  %v423 = vrot.slane %v157, 1
  %v424 = vsel %vm421, %v422, %v423
  %v425 = vrot.slane %v158, 1
  %v426 = vsel %vm421, %v423, %v425
  %v446 = vunpack.c.l.b16 %v402
  %v447 = vunpack.c.l.b16 %v403
  %v448 = vunpack.c.l.b16 %v404
  %v449 = vunpack.c.l.b16 %v405
  %v450 = vunpack.c.l.b16 %v406
  %v451 = vunpack.c.l.b16 %v407
  %v452 = vunpack.c.l.b16 %v408
  %v453 = vunpack.c.l.b16 %v409
  %v454 = vunpack.c.l.b16 %v410
  %v455 = vunpack.c.l.b16 %v411
  %v456 = vunpack.c.l.b16 %v412
  %v457 = vunpack.c.l.b16 %v413
  %v458 = vunpack.c.l.b16 %v414
  %v459 = vunpack.c.l.b16 %v415
  %v460 = vunpack.c.l.b16 %v416
  %v461 = vunpack.c.l.b16 %v417
  %v462 = vpack.c.b16 %v447, %v446
  %v463 = vpack.c.b16 %v449, %v448
  %v464 = vpack.c.b16 %v451, %v450
  %v465 = vpack.c.b16 %v453, %v452
  %v466 = vpack.c.b16 %v455, %v454
  %v467 = vpack.c.b16 %v457, %v456
  %v468 = vpack.c.b16 %v459, %v458
  %v469 = vpack.c.b16 %v461, %v460
  %478 = vmatprep.subr.bf16.mxu0 0
  %479 = vmatpush1.bf16.msra.mxu0 %v469
  %480 = vmatprep.subr.bf16.mxu0 0
  %481 = vmatpush1.bf16.msra.mxu0 %v468
  %482 = vmatprep.subr.bf16.mxu0 0
  %483 = vmatpush1.bf16.msra.mxu0 %v467
  %484 = vmatprep.subr.bf16.mxu0 0
  %485 = vmatpush1.bf16.msra.mxu0 %v466
  %486 = vmatprep.subr.bf16.mxu0 0
  %487 = vmatpush1.bf16.msra.mxu0 %v465
  %488 = vmatprep.subr.bf16.mxu0 0
  %489 = vmatpush1.bf16.msra.mxu0 %v464
  %490 = vmatprep.subr.bf16.mxu0 0
  %491 = vmatpush1.bf16.msra.mxu0 %v463
  %492 = vmatprep.subr.bf16.mxu0 0
  %493 = vmatpush1.bf16.msra.mxu0 %v462
  %494 = vmatprep.subr.bf16.mxu0 0
  %495 = vmatpush2.bf16.msra.mxu0 0
  %496 = vmatprep.subr.bf16.mxu0 0
  %497 = vmatpush2.bf16.msra.mxu0 0
  %498 = vmatprep.subr.bf16.mxu0 0
  %499 = vmatpush2.bf16.msra.mxu0 0
  %500 = vmatprep.subr.bf16.mxu0 0
  %501 = vmatpush2.bf16.msra.mxu0 0
  %502 = vmatprep.subr.bf16.mxu0 0
  %503 = vmatpush2.bf16.msra.mxu0 0
  %504 = vmatprep.subr.bf16.mxu0 0
  %505 = vmatpush2.bf16.msra.mxu0 0
  %506 = vmatprep.subr.bf16.mxu0 0
  %507 = vmatpush2.bf16.msra.mxu0 0
  %508 = vmatprep.subr.bf16.mxu0 0
  %509 = vmatpush2.bf16.msra.mxu0 0
  %510 = vmatprep.mubr.bf16.mxu0 0
  %511 = vmatmul.mubr.bf16.gmra.mxu0 %v424
  %v512 = vpop.f32.mrf.mxu0
  %v513 = vadd.f32 0.0, %v512
  %v514 = vpop.f32.mrf.mxu0
  %v515 = vpop.f32.mrf.mxu0
  %v516 = vadd.f32 0.0, %v515
  %v517 = vpop.f32.mrf.mxu0
  %518 = vmatprep.mubr.bf16.mxu0 0
  %519 = vmatmul.mubr.bf16.gmra.mxu0 %v426
  %v520 = vpop.f32.mrf.mxu0
  %v521 = vadd.f32 0.0, %v520
  %v522 = vpop.f32.mrf.mxu0
  %v523 = vpop.f32.mrf.mxu0
  %v524 = vadd.f32 0.0, %v523
  %v525 = vpop.f32.mrf.mxu0
  %526 = vmatprep.mubr.bf16.mxu0 0
  %527 = vmatmul.mubr.bf16.gmra.mxu0 %v425
  %v528 = vpop.f32.mrf.mxu0
  %v529 = vadd.f32 0.0, %v528
  %v530 = vpop.f32.mrf.mxu0
  %v531 = vpop.f32.mrf.mxu0
  %v532 = vpop.f32.mrf.mxu0
  %533 = vdwg.mxu0
  %v534 = vadd.f32 %v379, %v513
  %v535 = vadd.f32 %v382, %v516
  %v536 = vadd.f32 %v387, %v521
  %v537 = vadd.f32 %v390, %v524
  %v538 = vadd.f32 %v395, %v529
  %v539 = vpack.c.bf16 %v535, %v534
  %v541 = vunpack.c.l.b16 %v539
  %v542 = vunpack.c.h.b16 %v539
  %v543 = vpack.c.b16 %v541, %v541
  %v544 = vpack.c.b16 %v542, %v542
  %547 = vst [vmem:[%s2] sm:$0xf] %v543
  %548 = vst [vmem:[%s2 + $0x4] sm:$0xf] %v544
  %v549 = vadd.f32 %v534, %v535
  %v550 = vrot.slane %v549, 4
  %v551 = vadd.f32 %v549, %v550
  %v552 = vrot.slane %v551, 2
  %v553 = vadd.f32 %v551, %v552
  %v554 = vrot.slane %v553, 1
  %v555 = vadd.f32 %v553, %v554
  %v556 = vadd.f32 %v555, 0.0
  %v557 = vmul.f32 %v534, %v534
  %v558 = vmul.f32 %v535, %v535
  %v559 = vadd.f32 %v557, %v558
  %v560 = vrot.slane %v559, 4
  %v561 = vadd.f32 %v559, %v560
  %v562 = vrot.slane %v561, 2
  %v563 = vadd.f32 %v561, %v562
  %v564 = vrot.slane %v563, 1
  %v565 = vadd.f32 %v563, %v564
  %v566 = vadd.f32 %v565, 0.0
  %v567 = vpack.c.bf16 %v537, %v536
  %v568 = vpack.c.bf16 %v538, %v538
  %v571 = vunpack.c.l.b16 %v567
  %v572 = vunpack.c.h.b16 %v567
  %v573 = vunpack.c.l.b16 %v568
  %v574 = vpack.c.b16 %v571, %v571
  %v575 = vpack.c.b16 %v572, %v572
  %v576 = vpack.c.b16 %v573, %v573
  %vm577 = vcmask 1042432
  %vm578 = vcmask 1046532
  %vm579 = vmor %vm577, %vm578
  %v580 = vrot.slane %v574, 5
  %v581 = vrot.slane %v580, 4
  %v582 = vrot.slane %v575, 5
  %v583 = vsel %vm579, %v581, %v582
  %v584 = vrot.slane %v582, 4
  %v585 = vrot.slane %v576, 5
  %v586 = vsel %vm579, %v584, %v585
  %s589 = scalar_lea.vmem %s2, 8
  %590 = vst [vmem:[%s589] sm:$0xf] %v583
  %591 = vst [vmem:[%s589 + $0x4] sm:$0xf] %v586
  %vm595 = vcmask 1045504
  %v596 = vrot.slane %v536, 2
  %v597 = vrot.slane %v537, 2
  %v598 = vsel %vm595, %v596, %v597
  %v599 = vrot.slane %v538, 2
  %v600 = vsel %vm595, %v597, %v599
  %v603 = vadd.f32 %v598, %v600
  %v604 = vrot.slane %v603, 4
  %v605 = vadd.f32 %v603, %v604
  %v606 = vrot.slane %v605, 2
  %v607 = vadd.f32 %v605, %v606
  %v608 = vrot.slane %v607, 1
  %v609 = vadd.f32 %v607, %v608
  %v610 = vadd.f32 %v556, %v609
  %v611 = vmul.f32 %v536, %v536
  %v612 = vmul.f32 %v537, %v537
  %v613 = vmul.f32 %v538, %v538
  %v617 = vrot.slane %v611, 2
  %v618 = vrot.slane %v612, 2
  %v619 = vsel %vm595, %v617, %v618
  %v620 = vrot.slane %v613, 2
  %v621 = vsel %vm595, %v618, %v620
  %v624 = vadd.f32 %v619, %v621
  %v625 = vrot.slane %v624, 4
  %v626 = vadd.f32 %v624, %v625
  %v627 = vrot.slane %v626, 2
  %v628 = vadd.f32 %v626, %v627
  %v629 = vrot.slane %v628, 1
  %v630 = vadd.f32 %v628, %v629
  %v631 = vadd.f32 %v566, %v630
  %632 = vst [vmem:[%s3] sm:$0x1] %v610
  %633 = vst [vmem:[%s3 + $0x1] sm:$0x1] %v631
  // Predicated region
  $region10: #{basic_block_forward.3} parent=0 // pred_check
    _
  $region11: #{basic_block_forward.3} parent=0 // pred_check_branch
    %635 = sbr.rel (0) target = $region13
  $region12: #{basic_block_forward.3} parent=0 // pred_region
    _
  $region13: #{basic_block_forward.3} parent=0 // pred_fallthru
    _
  // Predicated region
  $region14: #{basic_block_forward.3} parent=0 // pred_check
    _
  $region15: #{basic_block_forward.3} parent=0 // pred_check_branch
    %637 = sbr.rel (0) target = $region17
  $region16: #{basic_block_forward.3} parent=0 // pred_region
    _
  $region17: #{basic_block_forward.3} parent=0 // pred_fallthru
    _
  // Predicated region
  $region18: #{basic_block_forward.3} parent=0 // pred_check
    _
  $region19: #{basic_block_forward.3} parent=0 // pred_check_branch
    %639 = sbr.rel (0) target = $region21
  $region20: #{basic_block_forward.3} parent=0 // pred_region
    _
  $region21: #{basic_block_forward.3} parent=0 // pred_fallthru
    _
  // Predicated region
  $region22: #{basic_block_forward.3} parent=0 // pred_check
    _
  $region23: #{basic_block_forward.3} parent=0 // pred_check_branch
    %641 = sbr.rel (0) target = $region25
  $region24: #{basic_block_forward.3} parent=0 // pred_region
    _
  $region25: #{basic_block_forward.3} parent=0 // pred_fallthru
    _

// kernel: basic_block_forward.4
$region0: #{basic_block_forward.4}
  #allocation0 [shape = 'u32[]', space=smem, size = 0x4, offset = 0x4, fixed_abs, tag = 'smem constant byte address 0x4 - core index']
  #allocation1 [shape = 'u32[144,128]{1,0:T(1,128)}', space=vmem, size = 0x12000, scoped, tag = 'internal scratch']
  #allocation2 [shape = 'bf16[36,128]{1,0:T(8,128)(2,1)}', space=vmem, size = 0x2800, scoped, tag = 'scratch operand']
  %s0 = inlined_call_operand.vmem [shape: bf16[2,16,128], index: 0, kind: input, shape index: {}]
  %s1 = inlined_call_operand.vmem [shape: f32[1,128], index: 1, kind: input, shape index: {}]
  %s2 = inlined_call_operand.vmem [shape: f32[1,128], index: 2, kind: input, shape index: {}]
  %s3 = inlined_call_operand.vmem [shape: bf16[3,128,128], index: 3, kind: input, shape index: {}]
  %s4 = inlined_call_operand.vmem [shape: bf16[2,16,128], index: 4, kind: output, shape index: {0}]
  %s5 = inlined_call_operand.vmem [shape: f32[1,2,128], index: 5, kind: output, shape index: {1}]
  %6 = xla_tuple %s4, %s5
  %s7 = sld [smem:[#allocation0]]
  $region34: #{basic_block_forward.4} parent=0
    _
  %s9 = ssub.s32 1, %s7
  %s10 = scalar_select 0, %s9, %s7
  // Predicated region
  $region2: #{basic_block_forward.4} parent=0 // pred_check
    _
  $region3: #{basic_block_forward.4} parent=0 // pred_check_branch
    %12 = sbr.rel (0) target = $region5
  $region4: #{basic_block_forward.4} parent=0 // pred_region
    _
  $region5: #{basic_block_forward.4} parent=0 // pred_fallthru
    _
  // Predicated region
  $region6: #{basic_block_forward.4} parent=0 // pred_check
    _
  $region7: #{basic_block_forward.4} parent=0 // pred_check_branch
    %14 = sbr.rel (0) target = $region9
  $region8: #{basic_block_forward.4} parent=0 // pred_region
    _
  $region9: #{basic_block_forward.4} parent=0 // pred_fallthru
    _
  // Predicated region
  $region10: #{basic_block_forward.4} parent=0 // pred_check
    _
  $region11: #{basic_block_forward.4} parent=0 // pred_check_branch
    %16 = sbr.rel (0) target = $region13
  $region12: #{basic_block_forward.4} parent=0 // pred_region
    _
  $region13: #{basic_block_forward.4} parent=0 // pred_fallthru
    _
  // Predicated region
  $region14: #{basic_block_forward.4} parent=0 // pred_check
    _
  $region15: #{basic_block_forward.4} parent=0 // pred_check_branch
    %18 = sbr.rel (0) target = $region17
  $region16: #{basic_block_forward.4} parent=0 // pred_region
    _
  $region17: #{basic_block_forward.4} parent=0 // pred_fallthru
    _
  %v20 = vld [vmem:[%s0] sm:$0xf]
  %v21 = vld [vmem:[%s0 + $0x4] sm:$0xf]
  %v22 = vunpack.c.l.bf16 %v20
  %v23 = vunpack.c.l.bf16 %v21
  %v24 = vld [vmem:[%s1] sm:$0x1]
  %v26 = vlaneseq
  %v27 = vshrl.u32 %v26, 7
  %v28 = vsub.s32 0, %v27
  %v29 = vrot.slane %v24, %v28
  %v31 = vmul.f32 %v22, %v29
  %v32 = vmul.f32 %v23, %v29
  %v33 = vld [vmem:[%s2] sm:$0x1]
  %v35 = vlaneseq
  %v36 = vshrl.u32 %v35, 7
  %v37 = vsub.s32 0, %v36
  %v38 = vrot.slane %v33, %v37
  %v40 = vadd.f32 %v31, %v38
  %v41 = vadd.f32 %v32, %v38
  %v42 = vmax.f32 %v40, 0.0
  %v43 = vmax.f32 %v41, 0.0
  %v44 = vpack.c.bf16 %v43, %v42
  %vm45 = vcmask 1040384
  %vm46 = vsmask.f32 256
  %vm47 = vmand %vm45, %vm46
  %v48 = vld [vmem:[#allocation2] sm:$0x1]
  %v49 = vsel %vm47, 0, %v48
  %50 = vst [vmem:[#allocation2] sm:$0x1] %v49
  %v52 = vunpack.c.l.b16 %v44
  %v53 = vunpack.c.h.b16 %v44
  %v54 = vpack.c.b16 %v52, %v52
  %v55 = vpack.c.b16 %v53, %v53
  %vm56 = vsmask.f32 4368
  %vm57 = vmor %vm46, %vm56
  %v59 = vshrl.u32 %v54, 16
  %v61 = vrot.slane %v59, 7
  %v62 = vshll.u32 %v54, 16
  %v64 = vor.u32 %v61, %v62
  %v65 = vrot.slane %v61, 4
  %v67 = vshrl.u32 %v55, 16
  %v69 = vrot.slane %v67, 7
  %v70 = vshll.u32 %v55, 16
  %v72 = vor.u32 %v69, %v70
  %v73 = vsel %vm57, %v65, %v72
  %v74 = vrot.slane %v69, 4
  %vm78 = vcmask 1043456
  %vm79 = vsmask.f32 7938
  %vm80 = vmand %vm78, %vm79
  %v81 = vld [vmem:[#allocation2] sm:$0xf]
  %v82 = vsel %vm80, %v64, %v81
  %83 = vst [vmem:[#allocation2] sm:$0xf] %v82
  %84 = vst [vmem:[#allocation2 + $0x4] sm:$0xf] %v73
  %v85 = vld [vmem:[#allocation2 + $0x8] sm:$0x1]
  %v86 = vsel %vm47, %v74, %v85
  %87 = vst [vmem:[#allocation2 + $0x8] sm:$0x1] %v86
  %vm88 = vmand %vm45, %vm79
  %v89 = vld [vmem:[#allocation2 + $0x8] sm:$0x1]
  %v90 = vsel %vm88, 0, %v89
  %91 = vst [vmem:[#allocation2 + $0x8] sm:$0x1] %v90
  %s92 = scalar_lea.vmem %s0, 8
  %v93 = vld [vmem:[%s92] sm:$0xf]
  %v94 = vld [vmem:[%s92 + $0x4] sm:$0xf]
  %v95 = vunpack.c.l.bf16 %v93
  %v96 = vunpack.c.l.bf16 %v94
  %v97 = vld [vmem:[%s1] sm:$0x1]
  %v99 = vlaneseq
  %v100 = vshrl.u32 %v99, 7
  %v101 = vsub.s32 0, %v100
  %v102 = vrot.slane %v97, %v101
  %v104 = vmul.f32 %v95, %v102
  %v105 = vmul.f32 %v96, %v102
  %v106 = vld [vmem:[%s2] sm:$0x1]
  %v108 = vlaneseq
  %v109 = vshrl.u32 %v108, 7
  %v110 = vsub.s32 0, %v109
  %v111 = vrot.slane %v106, %v110
  %v113 = vadd.f32 %v104, %v111
  %v114 = vadd.f32 %v105, %v111
  %v115 = vmax.f32 %v113, 0.0
  %v116 = vmax.f32 %v114, 0.0
  %v117 = vpack.c.bf16 %v116, %v115
  %vm118 = vcmask 1041409
  %vm119 = vsmask.f32 1280
  %vm120 = vmand %vm118, %vm119
  %v121 = vld [vmem:[#allocation2 + $0x8] sm:$0x2]
  %v122 = vsel %vm120, 0, %v121
  %123 = vst [vmem:[#allocation2 + $0x8] sm:$0x2] %v122
  %v125 = vunpack.c.l.b16 %v117
  %v126 = vunpack.c.h.b16 %v117
  %v127 = vpack.c.b16 %v125, %v125
  %v128 = vpack.c.b16 %v126, %v126
  %vm129 = vsmask.f32 5392
  %vm130 = vmor %vm119, %vm129
  %v132 = vshrl.u32 %v127, 16
  %v134 = vrot.slane %v132, 6
  %v135 = vshll.u32 %v127, 16
  %v137 = vrot.slane %v135, 7
  %v138 = vor.u32 %v134, %v137
  %v139 = vrot.slane %v138, 4
  %v141 = vshrl.u32 %v128, 16
  %v143 = vrot.slane %v141, 6
  %v144 = vshll.u32 %v128, 16
  %v146 = vrot.slane %v144, 7
  %v147 = vor.u32 %v143, %v146
  %v148 = vsel %vm130, %v139, %v147
  %v149 = vrot.slane %v147, 4
  %vm153 = vcmask 1043457
  %vm154 = vsmask.f32 7942
  %vm155 = vmand %vm153, %vm154
  %v156 = vld [vmem:[#allocation2 + $0x8] sm:$0xe]
  %v157 = vsel %vm155, %v138, %v156
  %158 = vst [vmem:[#allocation2 + $0x8] sm:$0xe] %v157
  %159 = vst [vmem:[#allocation2 + $0xc] sm:$0xf] %v148
  %vm160 = vcmask 1041408
  %vm161 = vmand %vm160, %vm119
  %v162 = vld [vmem:[#allocation2 + $0x10] sm:$0x3]
  %v163 = vsel %vm161, %v149, %v162
  %164 = vst [vmem:[#allocation2 + $0x10] sm:$0x3] %v163
  %vm165 = vmand %vm118, %vm154
  %v166 = vld [vmem:[#allocation2 + $0x10] sm:$0x2]
  %v167 = vsel %vm165, 0, %v166
  %168 = vst [vmem:[#allocation2 + $0x10] sm:$0x2] %v167
  %v169 = vld [vmem:[#allocation2] sm:$0xf]
  %v170 = vld [vmem:[#allocation2 + $0x4] sm:$0xf]
  %v171 = vld [vmem:[#allocation2 + $0x8] sm:$0xf]
  %v172 = vld [vmem:[#allocation2 + $0xc] sm:$0xf]
  %v173 = vld [vmem:[#allocation2 + $0x10] sm:$0x1]
  %v174 = vld [vmem:[%s3] sm:$0xf]
  %v175 = vld [vmem:[%s3 + $0x4] sm:$0xf]
  %v176 = vld [vmem:[%s3 + $0x8] sm:$0xf]
  %v177 = vld [vmem:[%s3 + $0xc] sm:$0xf]
  %v178 = vld [vmem:[%s3 + $0x10] sm:$0xf]
  %v179 = vld [vmem:[%s3 + $0x14] sm:$0xf]
  %v180 = vld [vmem:[%s3 + $0x18] sm:$0xf]
  %v181 = vld [vmem:[%s3 + $0x1c] sm:$0xf]
  %v182 = vld [vmem:[%s3 + $0x20] sm:$0xf]
  %v183 = vld [vmem:[%s3 + $0x24] sm:$0xf]
  %v184 = vld [vmem:[%s3 + $0x28] sm:$0xf]
  %v185 = vld [vmem:[%s3 + $0x2c] sm:$0xf]
  %v186 = vld [vmem:[%s3 + $0x30] sm:$0xf]
  %v187 = vld [vmem:[%s3 + $0x34] sm:$0xf]
  %v188 = vld [vmem:[%s3 + $0x38] sm:$0xf]
  %v189 = vld [vmem:[%s3 + $0x3c] sm:$0xf]
  %v190 = vld [vmem:[#allocation2 + $0x10] sm:$0x3]
  %s191 = scalar_lea.vmem %s3, 64
  %v192 = vld [vmem:[%s191] sm:$0xf]
  %v193 = vld [vmem:[%s191 + $0x4] sm:$0xf]
  %v194 = vld [vmem:[%s191 + $0x8] sm:$0xf]
  %v195 = vld [vmem:[%s191 + $0xc] sm:$0xf]
  %v196 = vld [vmem:[%s191 + $0x10] sm:$0xf]
  %v197 = vld [vmem:[%s191 + $0x14] sm:$0xf]
  %v198 = vld [vmem:[%s191 + $0x18] sm:$0xf]
  %v199 = vld [vmem:[%s191 + $0x1c] sm:$0xf]
  %v200 = vld [vmem:[%s191 + $0x20] sm:$0xf]
  %v201 = vld [vmem:[%s191 + $0x24] sm:$0xf]
  %v202 = vld [vmem:[%s191 + $0x28] sm:$0xf]
  %v203 = vld [vmem:[%s191 + $0x2c] sm:$0xf]
  %v204 = vld [vmem:[%s191 + $0x30] sm:$0xf]
  %v205 = vld [vmem:[%s191 + $0x34] sm:$0xf]
  %v206 = vld [vmem:[%s191 + $0x38] sm:$0xf]
  %v207 = vld [vmem:[%s191 + $0x3c] sm:$0xf]
  %v213 = vunpack.c.l.b16 %v169
  %v214 = vunpack.c.l.b16 %v170
  %v215 = vunpack.c.l.b16 %v171
  %v216 = vunpack.c.l.b16 %v172
  %v217 = vunpack.c.l.b16 %v190
  %v218 = vpack.c.b16 %v214, %v213
  %v219 = vpack.c.b16 %v216, %v215
  %v220 = vpack.c.b16 %v217, %v217
  %vm221 = vsmask.f32 7424
  %v223 = vshrl.u32 %v218, 16
  %v225 = vshll.u32 %v218, 16
  %v227 = vrot.slane %v225, 1
  %v228 = vor.u32 %v223, %v227
  %v230 = vshll.u32 %v219, 16
  %v232 = vrot.slane %v230, 1
  %v233 = vsel %vm221, %v228, %v232
  %v234 = vshrl.u32 %v219, 16
  %v236 = vor.u32 %v234, %v232
  %v238 = vshll.u32 %v220, 16
  %v240 = vrot.slane %v238, 1
  %v241 = vsel %vm221, %v236, %v240
  %v242 = vshrl.u32 %v220, 16
  %v244 = vor.u32 %v242, %v240
  %v264 = vunpack.c.l.b16 %v192
  %v265 = vunpack.c.l.b16 %v193
  %v266 = vunpack.c.l.b16 %v194
  %v267 = vunpack.c.l.b16 %v195
  %v268 = vunpack.c.l.b16 %v196
  %v269 = vunpack.c.l.b16 %v197
  %v270 = vunpack.c.l.b16 %v198
  %v271 = vunpack.c.l.b16 %v199
  %v272 = vunpack.c.l.b16 %v200
  %v273 = vunpack.c.l.b16 %v201
  %v274 = vunpack.c.l.b16 %v202
  %v275 = vunpack.c.l.b16 %v203
  %v276 = vunpack.c.l.b16 %v204
  %v277 = vunpack.c.l.b16 %v205
  %v278 = vunpack.c.l.b16 %v206
  %v279 = vunpack.c.l.b16 %v207
  %v280 = vpack.c.b16 %v265, %v264
  %v281 = vpack.c.b16 %v267, %v266
  %v282 = vpack.c.b16 %v269, %v268
  %v283 = vpack.c.b16 %v271, %v270
  %v284 = vpack.c.b16 %v273, %v272
  %v285 = vpack.c.b16 %v275, %v274
  %v286 = vpack.c.b16 %v277, %v276
  %v287 = vpack.c.b16 %v279, %v278
  %296 = vmatprep.subr.bf16.mxu0 0
  %297 = vmatpush1.bf16.msra.mxu0 %v287
  %298 = vmatprep.subr.bf16.mxu0 0
  %299 = vmatpush1.bf16.msra.mxu0 %v286
  %300 = vmatprep.subr.bf16.mxu0 0
  %301 = vmatpush1.bf16.msra.mxu0 %v285
  %302 = vmatprep.subr.bf16.mxu0 0
  %303 = vmatpush1.bf16.msra.mxu0 %v284
  %304 = vmatprep.subr.bf16.mxu0 0
  %305 = vmatpush1.bf16.msra.mxu0 %v283
  %306 = vmatprep.subr.bf16.mxu0 0
  %307 = vmatpush1.bf16.msra.mxu0 %v282
  %308 = vmatprep.subr.bf16.mxu0 0
  %309 = vmatpush1.bf16.msra.mxu0 %v281
  %310 = vmatprep.subr.bf16.mxu0 0
  %311 = vmatpush1.bf16.msra.mxu0 %v280
  %312 = vmatprep.subr.bf16.mxu0 0
  %313 = vmatpush2.bf16.msra.mxu0 0
  %314 = vmatprep.subr.bf16.mxu0 0
  %315 = vmatpush2.bf16.msra.mxu0 0
  %316 = vmatprep.subr.bf16.mxu0 0
  %317 = vmatpush2.bf16.msra.mxu0 0
  %318 = vmatprep.subr.bf16.mxu0 0
  %319 = vmatpush2.bf16.msra.mxu0 0
  %320 = vmatprep.subr.bf16.mxu0 0
  %321 = vmatpush2.bf16.msra.mxu0 0
  %322 = vmatprep.subr.bf16.mxu0 0
  %323 = vmatpush2.bf16.msra.mxu0 0
  %324 = vmatprep.subr.bf16.mxu0 0
  %325 = vmatpush2.bf16.msra.mxu0 0
  %326 = vmatprep.subr.bf16.mxu0 0
  %327 = vmatpush2.bf16.msra.mxu0 0
  %328 = vmatprep.mubr.bf16.mxu0 0
  %329 = vmatmul.mubr.bf16.gmra.mxu0 %v233
  %v330 = vpop.f32.mrf.mxu0
  %v331 = vadd.f32 0.0, %v330
  %v332 = vpop.f32.mrf.mxu0
  %v333 = vpop.f32.mrf.mxu0
  %v334 = vadd.f32 0.0, %v333
  %v335 = vpop.f32.mrf.mxu0
  %336 = vmatprep.mubr.bf16.mxu0 0
  %337 = vmatmul.mubr.bf16.gmra.mxu0 %v241
  %v338 = vpop.f32.mrf.mxu0
  %v339 = vadd.f32 0.0, %v338
  %v340 = vpop.f32.mrf.mxu0
  %v341 = vpop.f32.mrf.mxu0
  %v342 = vadd.f32 0.0, %v341
  %v343 = vpop.f32.mrf.mxu0
  %344 = vmatprep.mubr.bf16.mxu0 0
  %345 = vmatmul.mubr.bf16.gmra.mxu0 %v244
  %v346 = vpop.f32.mrf.mxu0
  %v347 = vadd.f32 0.0, %v346
  %v348 = vpop.f32.mrf.mxu0
  %v349 = vpop.f32.mrf.mxu0
  %v350 = vpop.f32.mrf.mxu0
  %351 = vdwg.mxu0
  %v353 = vunpack.c.l.b16 %v173
  %v354 = vpack.c.b16 %v353, %v353
  %v374 = vunpack.c.l.b16 %v174
  %v375 = vunpack.c.l.b16 %v175
  %v376 = vunpack.c.l.b16 %v176
  %v377 = vunpack.c.l.b16 %v177
  %v378 = vunpack.c.l.b16 %v178
  %v379 = vunpack.c.l.b16 %v179
  %v380 = vunpack.c.l.b16 %v180
  %v381 = vunpack.c.l.b16 %v181
  %v382 = vunpack.c.l.b16 %v182
  %v383 = vunpack.c.l.b16 %v183
  %v384 = vunpack.c.l.b16 %v184
  %v385 = vunpack.c.l.b16 %v185
  %v386 = vunpack.c.l.b16 %v186
  %v387 = vunpack.c.l.b16 %v187
  %v388 = vunpack.c.l.b16 %v188
  %v389 = vunpack.c.l.b16 %v189
  %v390 = vpack.c.b16 %v375, %v374
  %v391 = vpack.c.b16 %v377, %v376
  %v392 = vpack.c.b16 %v379, %v378
  %v393 = vpack.c.b16 %v381, %v380
  %v394 = vpack.c.b16 %v383, %v382
  %v395 = vpack.c.b16 %v385, %v384
  %v396 = vpack.c.b16 %v387, %v386
  %v397 = vpack.c.b16 %v389, %v388
  %406 = vmatprep.subr.bf16.mxu0 0
  %407 = vmatpush1.bf16.msra.mxu0 %v397
  %408 = vmatprep.subr.bf16.mxu0 0
  %409 = vmatpush1.bf16.msra.mxu0 %v396
  %410 = vmatprep.subr.bf16.mxu0 0
  %411 = vmatpush1.bf16.msra.mxu0 %v395
  %412 = vmatprep.subr.bf16.mxu0 0
  %413 = vmatpush1.bf16.msra.mxu0 %v394
  %414 = vmatprep.subr.bf16.mxu0 0
  %415 = vmatpush1.bf16.msra.mxu0 %v393
  %416 = vmatprep.subr.bf16.mxu0 0
  %417 = vmatpush1.bf16.msra.mxu0 %v392
  %418 = vmatprep.subr.bf16.mxu0 0
  %419 = vmatpush1.bf16.msra.mxu0 %v391
  %420 = vmatprep.subr.bf16.mxu0 0
  %421 = vmatpush1.bf16.msra.mxu0 %v390
  %422 = vmatprep.subr.bf16.mxu0 0
  %423 = vmatpush2.bf16.msra.mxu0 0
  %424 = vmatprep.subr.bf16.mxu0 0
  %425 = vmatpush2.bf16.msra.mxu0 0
  %426 = vmatprep.subr.bf16.mxu0 0
  %427 = vmatpush2.bf16.msra.mxu0 0
  %428 = vmatprep.subr.bf16.mxu0 0
  %429 = vmatpush2.bf16.msra.mxu0 0
  %430 = vmatprep.subr.bf16.mxu0 0
  %431 = vmatpush2.bf16.msra.mxu0 0
  %432 = vmatprep.subr.bf16.mxu0 0
  %433 = vmatpush2.bf16.msra.mxu0 0
  %434 = vmatprep.subr.bf16.mxu0 0
  %435 = vmatpush2.bf16.msra.mxu0 0
  %436 = vmatprep.subr.bf16.mxu0 0
  %437 = vmatpush2.bf16.msra.mxu0 0
  %438 = vmatprep.mubr.bf16.mxu0 0
  %439 = vmatmul.mubr.bf16.gmra.mxu0 %v218
  %v440 = vpop.f32.mrf.mxu0
  %v441 = vadd.f32 %v331, %v440
  %v442 = vpop.f32.mrf.mxu0
  %v443 = vpop.f32.mrf.mxu0
  %v444 = vadd.f32 %v334, %v443
  %v445 = vpop.f32.mrf.mxu0
  %446 = vmatprep.mubr.bf16.mxu0 0
  %447 = vmatmul.mubr.bf16.gmra.mxu0 %v219
  %v448 = vpop.f32.mrf.mxu0
  %v449 = vadd.f32 %v339, %v448
  %v450 = vpop.f32.mrf.mxu0
  %v451 = vpop.f32.mrf.mxu0
  %v452 = vadd.f32 %v342, %v451
  %v453 = vpop.f32.mrf.mxu0
  %454 = vmatprep.mubr.bf16.mxu0 0
  %455 = vmatmul.mubr.bf16.gmra.mxu0 %v354
  %v456 = vpop.f32.mrf.mxu0
  %v457 = vadd.f32 %v347, %v456
  %v458 = vpop.f32.mrf.mxu0
  %v459 = vpop.f32.mrf.mxu0
  %v460 = vpop.f32.mrf.mxu0
  %461 = vdwg.mxu0
  %v462 = vld [vmem:[#allocation2] sm:$0xe]
  %s463 = scalar_lea.vmem %s3, 128
  %v464 = vld [vmem:[%s463] sm:$0xf]
  %v465 = vld [vmem:[%s463 + $0x4] sm:$0xf]
  %v466 = vld [vmem:[%s463 + $0x8] sm:$0xf]
  %v467 = vld [vmem:[%s463 + $0xc] sm:$0xf]
  %v468 = vld [vmem:[%s463 + $0x10] sm:$0xf]
  %v469 = vld [vmem:[%s463 + $0x14] sm:$0xf]
  %v470 = vld [vmem:[%s463 + $0x18] sm:$0xf]
  %v471 = vld [vmem:[%s463 + $0x1c] sm:$0xf]
  %v472 = vld [vmem:[%s463 + $0x20] sm:$0xf]
  %v473 = vld [vmem:[%s463 + $0x24] sm:$0xf]
  %v474 = vld [vmem:[%s463 + $0x28] sm:$0xf]
  %v475 = vld [vmem:[%s463 + $0x2c] sm:$0xf]
  %v476 = vld [vmem:[%s463 + $0x30] sm:$0xf]
  %v477 = vld [vmem:[%s463 + $0x34] sm:$0xf]
  %v478 = vld [vmem:[%s463 + $0x38] sm:$0xf]
  %v479 = vld [vmem:[%s463 + $0x3c] sm:$0xf]
  %v481 = vunpack.c.l.b16 %v462
  %v482 = vpack.c.b16 %v214, %v481
  %vm483 = vcmask 1046528
  %v484 = vrot.slane %v482, 1
  %v485 = vrot.slane %v219, 1
  %v486 = vsel %vm483, %v484, %v485
  %v487 = vrot.slane %v220, 1
  %v488 = vsel %vm483, %v485, %v487
  %v508 = vunpack.c.l.b16 %v464
  %v509 = vunpack.c.l.b16 %v465
  %v510 = vunpack.c.l.b16 %v466
  %v511 = vunpack.c.l.b16 %v467
  %v512 = vunpack.c.l.b16 %v468
  %v513 = vunpack.c.l.b16 %v469
  %v514 = vunpack.c.l.b16 %v470
  %v515 = vunpack.c.l.b16 %v471
  %v516 = vunpack.c.l.b16 %v472
  %v517 = vunpack.c.l.b16 %v473
  %v518 = vunpack.c.l.b16 %v474
  %v519 = vunpack.c.l.b16 %v475
  %v520 = vunpack.c.l.b16 %v476
  %v521 = vunpack.c.l.b16 %v477
  %v522 = vunpack.c.l.b16 %v478
  %v523 = vunpack.c.l.b16 %v479
  %v524 = vpack.c.b16 %v509, %v508
  %v525 = vpack.c.b16 %v511, %v510
  %v526 = vpack.c.b16 %v513, %v512
  %v527 = vpack.c.b16 %v515, %v514
  %v528 = vpack.c.b16 %v517, %v516
  %v529 = vpack.c.b16 %v519, %v518
  %v530 = vpack.c.b16 %v521, %v520
  %v531 = vpack.c.b16 %v523, %v522
  %540 = vmatprep.subr.bf16.mxu0 0
  %541 = vmatpush1.bf16.msra.mxu0 %v531
  %542 = vmatprep.subr.bf16.mxu0 0
  %543 = vmatpush1.bf16.msra.mxu0 %v530
  %544 = vmatprep.subr.bf16.mxu0 0
  %545 = vmatpush1.bf16.msra.mxu0 %v529
  %546 = vmatprep.subr.bf16.mxu0 0
  %547 = vmatpush1.bf16.msra.mxu0 %v528
  %548 = vmatprep.subr.bf16.mxu0 0
  %549 = vmatpush1.bf16.msra.mxu0 %v527
  %550 = vmatprep.subr.bf16.mxu0 0
  %551 = vmatpush1.bf16.msra.mxu0 %v526
  %552 = vmatprep.subr.bf16.mxu0 0
  %553 = vmatpush1.bf16.msra.mxu0 %v525
  %554 = vmatprep.subr.bf16.mxu0 0
  %555 = vmatpush1.bf16.msra.mxu0 %v524
  %556 = vmatprep.subr.bf16.mxu0 0
  %557 = vmatpush2.bf16.msra.mxu0 0
  %558 = vmatprep.subr.bf16.mxu0 0
  %559 = vmatpush2.bf16.msra.mxu0 0
  %560 = vmatprep.subr.bf16.mxu0 0
  %561 = vmatpush2.bf16.msra.mxu0 0
  %562 = vmatprep.subr.bf16.mxu0 0
  %563 = vmatpush2.bf16.msra.mxu0 0
  %564 = vmatprep.subr.bf16.mxu0 0
  %565 = vmatpush2.bf16.msra.mxu0 0
  %566 = vmatprep.subr.bf16.mxu0 0
  %567 = vmatpush2.bf16.msra.mxu0 0
  %568 = vmatprep.subr.bf16.mxu0 0
  %569 = vmatpush2.bf16.msra.mxu0 0
  %570 = vmatprep.subr.bf16.mxu0 0
  %571 = vmatpush2.bf16.msra.mxu0 0
  %572 = vmatprep.mubr.bf16.mxu0 0
  %573 = vmatmul.mubr.bf16.gmra.mxu0 %v486
  %v574 = vpop.f32.mrf.mxu0
  %v575 = vadd.f32 0.0, %v574
  %v576 = vpop.f32.mrf.mxu0
  %v577 = vpop.f32.mrf.mxu0
  %v578 = vadd.f32 0.0, %v577
  %v579 = vpop.f32.mrf.mxu0
  %580 = vmatprep.mubr.bf16.mxu0 0
  %581 = vmatmul.mubr.bf16.gmra.mxu0 %v488
  %v582 = vpop.f32.mrf.mxu0
  %v583 = vadd.f32 0.0, %v582
  %v584 = vpop.f32.mrf.mxu0
  %v585 = vpop.f32.mrf.mxu0
  %v586 = vadd.f32 0.0, %v585
  %v587 = vpop.f32.mrf.mxu0
  %588 = vmatprep.mubr.bf16.mxu0 0
  %589 = vmatmul.mubr.bf16.gmra.mxu0 %v487
  %v590 = vpop.f32.mrf.mxu0
  %v591 = vadd.f32 0.0, %v590
  %v592 = vpop.f32.mrf.mxu0
  %v593 = vpop.f32.mrf.mxu0
  %v594 = vpop.f32.mrf.mxu0
  %595 = vdwg.mxu0
  %v596 = vadd.f32 %v441, %v575
  %v597 = vadd.f32 %v444, %v578
  %v598 = vadd.f32 %v449, %v583
  %v599 = vadd.f32 %v452, %v586
  %v600 = vadd.f32 %v457, %v591
  %v601 = vpack.c.bf16 %v597, %v596
  %v603 = vunpack.c.l.b16 %v601
  %v604 = vunpack.c.h.b16 %v601
  %v605 = vpack.c.b16 %v603, %v603
  %v606 = vpack.c.b16 %v604, %v604
  %609 = vst [vmem:[%s4] sm:$0xf] %v605
  %610 = vst [vmem:[%s4 + $0x4] sm:$0xf] %v606
  %v611 = vadd.f32 %v596, %v597
  %v612 = vrot.slane %v611, 4
  %v613 = vadd.f32 %v611, %v612
  %v614 = vrot.slane %v613, 2
  %v615 = vadd.f32 %v613, %v614
  %v616 = vrot.slane %v615, 1
  %v617 = vadd.f32 %v615, %v616
  %v618 = vadd.f32 %v617, 0.0
  %v619 = vmul.f32 %v596, %v596
  %v620 = vmul.f32 %v597, %v597
  %v621 = vadd.f32 %v619, %v620
  %v622 = vrot.slane %v621, 4
  %v623 = vadd.f32 %v621, %v622
  %v624 = vrot.slane %v623, 2
  %v625 = vadd.f32 %v623, %v624
  %v626 = vrot.slane %v625, 1
  %v627 = vadd.f32 %v625, %v626
  %v628 = vadd.f32 %v627, 0.0
  %v629 = vpack.c.bf16 %v599, %v598
  %v630 = vpack.c.bf16 %v600, %v600
  %v633 = vunpack.c.l.b16 %v629
  %v634 = vunpack.c.h.b16 %v629
  %v635 = vunpack.c.l.b16 %v630
  %v636 = vpack.c.b16 %v633, %v633
  %v637 = vpack.c.b16 %v634, %v634
  %v638 = vpack.c.b16 %v635, %v635
  %vm639 = vcmask 1042432
  %vm640 = vcmask 1046532
  %vm641 = vmor %vm639, %vm640
  %v642 = vrot.slane %v636, 5
  %v643 = vrot.slane %v642, 4
  %v644 = vrot.slane %v637, 5
  %v645 = vsel %vm641, %v643, %v644
  %v646 = vrot.slane %v644, 4
  %v647 = vrot.slane %v638, 5
  %v648 = vsel %vm641, %v646, %v647
  %s651 = scalar_lea.vmem %s4, 8
  %652 = vst [vmem:[%s651] sm:$0xf] %v645
  %653 = vst [vmem:[%s651 + $0x4] sm:$0xf] %v648
  %vm657 = vcmask 1045504
  %v658 = vrot.slane %v598, 2
  %v659 = vrot.slane %v599, 2
  %v660 = vsel %vm657, %v658, %v659
  %v661 = vrot.slane %v600, 2
  %v662 = vsel %vm657, %v659, %v661
  %v665 = vadd.f32 %v660, %v662
  %v666 = vrot.slane %v665, 4
  %v667 = vadd.f32 %v665, %v666
  %v668 = vrot.slane %v667, 2
  %v669 = vadd.f32 %v667, %v668
  %v670 = vrot.slane %v669, 1
  %v671 = vadd.f32 %v669, %v670
  %v672 = vadd.f32 %v618, %v671
  %v673 = vmul.f32 %v598, %v598
  %v674 = vmul.f32 %v599, %v599
  %v675 = vmul.f32 %v600, %v600
  %v679 = vrot.slane %v673, 2
  %v680 = vrot.slane %v674, 2
  %v681 = vsel %vm657, %v679, %v680
  %v682 = vrot.slane %v675, 2
  %v683 = vsel %vm657, %v680, %v682
  %v686 = vadd.f32 %v681, %v683
  %v687 = vrot.slane %v686, 4
  %v688 = vadd.f32 %v686, %v687
  %v689 = vrot.slane %v688, 2
  %v690 = vadd.f32 %v688, %v689
  %v691 = vrot.slane %v690, 1
  %v692 = vadd.f32 %v690, %v691
  %v693 = vadd.f32 %v628, %v692
  %694 = vst [vmem:[%s5] sm:$0x1] %v672
  %695 = vst [vmem:[%s5 + $0x1] sm:$0x1] %v693
  // Predicated region
  $region18: #{basic_block_forward.4} parent=0 // pred_check
    _
  $region19: #{basic_block_forward.4} parent=0 // pred_check_branch
    %697 = sbr.rel (0) target = $region21
  $region20: #{basic_block_forward.4} parent=0 // pred_region
    _
  $region21: #{basic_block_forward.4} parent=0 // pred_fallthru
    _
  // Predicated region
  $region22: #{basic_block_forward.4} parent=0 // pred_check
    _
  $region23: #{basic_block_forward.4} parent=0 // pred_check_branch
    %699 = sbr.rel (0) target = $region25
  $region24: #{basic_block_forward.4} parent=0 // pred_region
    _
  $region25: #{basic_block_forward.4} parent=0 // pred_fallthru
    _
  // Predicated region
  $region26: #{basic_block_forward.4} parent=0 // pred_check
    _
  $region27: #{basic_block_forward.4} parent=0 // pred_check_branch
    %701 = sbr.rel (0) target = $region29
  $region28: #{basic_block_forward.4} parent=0 // pred_region
    _
  $region29: #{basic_block_forward.4} parent=0 // pred_fallthru
    _
  // Predicated region
  $region30: #{basic_block_forward.4} parent=0 // pred_check
    _
  $region31: #{basic_block_forward.4} parent=0 // pred_check_branch
    %703 = sbr.rel (0) target = $region33
  $region32: #{basic_block_forward.4} parent=0 // pred_region
    _
  $region33: #{basic_block_forward.4} parent=0 // pred_fallthru
    _

// kernel: basic_block_forward.5
$region0: #{basic_block_forward.5}
  #allocation0 [shape = 'u32[]', space=smem, size = 0x4, offset = 0x4, fixed_abs, tag = 'smem constant byte address 0x4 - core index']
  #allocation1 [shape = 'u32[144,128]{1,0:T(1,128)}', space=vmem, size = 0x12000, scoped, tag = 'internal scratch']
  %s0 = inlined_call_operand.vmem [shape: bf16[32,128], index: 0, kind: input, shape index: {}]
  %s1 = inlined_call_operand.vmem [shape: f32[1,128], index: 1, kind: input, shape index: {}]
  %s2 = inlined_call_operand.vmem [shape: f32[1,128], index: 2, kind: input, shape index: {}]
  %s3 = inlined_call_operand.vmem [shape: f32[32,128], index: 3, kind: input, shape index: {}]
  %s4 = inlined_call_operand.vmem [shape: f32[32,128], index: 4, kind: output, shape index: {}]
  %s5 = sld [smem:[#allocation0]]
  $region26: #{basic_block_forward.5} parent=0
    _
  %s7 = ssub.s32 1, %s5
  %s8 = scalar_select 0, %s7, %s5
  // Predicated region
  $region2: #{basic_block_forward.5} parent=0 // pred_check
    _
  $region3: #{basic_block_forward.5} parent=0 // pred_check_branch
    %10 = sbr.rel (0) target = $region5
  $region4: #{basic_block_forward.5} parent=0 // pred_region
    _
  $region5: #{basic_block_forward.5} parent=0 // pred_fallthru
    _
  // Predicated region
  $region6: #{basic_block_forward.5} parent=0 // pred_check
    _
  $region7: #{basic_block_forward.5} parent=0 // pred_check_branch
    %12 = sbr.rel (0) target = $region9
  $region8: #{basic_block_forward.5} parent=0 // pred_region
    _
  $region9: #{basic_block_forward.5} parent=0 // pred_fallthru
    _
  // Predicated region
  $region10: #{basic_block_forward.5} parent=0 // pred_check
    _
  $region11: #{basic_block_forward.5} parent=0 // pred_check_branch
    %14 = sbr.rel (0) target = $region13
  $region12: #{basic_block_forward.5} parent=0 // pred_region
    _
  $region13: #{basic_block_forward.5} parent=0 // pred_fallthru
    _
  // Predicated region
  $region14: #{basic_block_forward.5} parent=0 // pred_check
    _
  $region15: #{basic_block_forward.5} parent=0 // pred_check_branch
    %16 = sbr.rel (0) target = $region17
  $region16: #{basic_block_forward.5} parent=0 // pred_region
    _
  $region17: #{basic_block_forward.5} parent=0 // pred_fallthru
    _
  %v17 = vld [vmem:[%s0] sm:$0xf]
  %v18 = vld [vmem:[%s0 + $0x4] sm:$0xf]
  %v19 = vld [vmem:[%s0 + $0x8] sm:$0xf]
  %v20 = vld [vmem:[%s0 + $0xc] sm:$0xf]
  %v21 = vunpack.c.l.bf16 %v17
  %v22 = vunpack.c.l.bf16 %v18
  %v23 = vunpack.c.l.bf16 %v19
  %v24 = vunpack.c.l.bf16 %v20
  %v25 = vld [vmem:[%s1] sm:$0x1]
  %v27 = vlaneseq
  %v28 = vshrl.u32 %v27, 7
  %v29 = vsub.s32 0, %v28
  %v30 = vrot.slane %v25, %v29
  %v32 = vmul.f32 %v21, %v30
  %v33 = vmul.f32 %v22, %v30
  %v34 = vmul.f32 %v23, %v30
  %v35 = vmul.f32 %v24, %v30
  %v36 = vld [vmem:[%s2] sm:$0x1]
  %v38 = vlaneseq
  %v39 = vshrl.u32 %v38, 7
  %v40 = vsub.s32 0, %v39
  %v41 = vrot.slane %v36, %v40
  %v43 = vadd.f32 %v32, %v41
  %v44 = vadd.f32 %v33, %v41
  %v45 = vadd.f32 %v34, %v41
  %v46 = vadd.f32 %v35, %v41
  %v47 = vld [vmem:[%s3] sm:$0xff]
  %v48 = vld [vmem:[%s3 + $0x8] sm:$0xff]
  %v49 = vld [vmem:[%s3 + $0x10] sm:$0xff]
  %v50 = vld [vmem:[%s3 + $0x18] sm:$0xff]
  %v51 = vadd.f32 %v43, %v47
  %v52 = vadd.f32 %v44, %v48
  %v53 = vadd.f32 %v45, %v49
  %v54 = vadd.f32 %v46, %v50
  %v55 = vmax.f32 %v51, 0.0
  %v56 = vmax.f32 %v52, 0.0
  %v57 = vmax.f32 %v53, 0.0
  %v58 = vmax.f32 %v54, 0.0
  %59 = vst [vmem:[%s4] sm:$0xff] %v55
  %60 = vst [vmem:[%s4 + $0x8] sm:$0xff] %v56
  %61 = vst [vmem:[%s4 + $0x10] sm:$0xff] %v57
  %62 = vst [vmem:[%s4 + $0x18] sm:$0xff] %v58
  // Predicated region
  $region18: #{basic_block_forward.5} parent=0 // pred_check
    _
  $region19: #{basic_block_forward.5} parent=0 // pred_check_branch
    %64 = sbr.rel (0) target = $region21
  $region20: #{basic_block_forward.5} parent=0 // pred_region
    _
  $region21: #{basic_block_forward.5} parent=0 // pred_fallthru
    _
  // Predicated region
  $region22: #{basic_block_forward.5} parent=0 // pred_check
    _
  $region23: #{basic_block_forward.5} parent=0 // pred_check_branch
    %66 = sbr.rel (0) target = $region25
  $region24: #{basic_block_forward.5} parent=0 // pred_region
    _
  $region25: #{basic_block_forward.5} parent=0 // pred_fallthru
    _

</llo_original>
